<compile_context>
chip_gen: v5e
topology: v5e:2x2
jax: 0.10.0
libtpu: 0.0.40
codegen_flags: <defaults>
</compile_context>

<pallas_src>
import math

import numpy as np
import jax
import jax.numpy as jnp
from jax import lax
from jax.experimental import pallas as pl
from jax.experimental.pallas import tpu as pltpu

# ---------------- model config ----------------
BATCH = 2
IMG = 16
CHANNELS = 3
PATCH = 8
HIDDEN = 32
NUM_HEADS = 2
HEAD_DIM = HIDDEN // NUM_HEADS
NUM_LAYERS = 2
MLP_DIM = 4 * HIDDEN
NUM_CLASSES = 12
CLS_PAD = 128            # lane-dense classifier output width
OUT_ROWS = 8             # sublane-dense classifier output rows (B padded to 8)
LN_EPS = 1e-12
NUM_PATCHES = (IMG // PATCH) ** 2
SEQ = NUM_PATCHES + 1
PATCH_DIM = CHANNELS * PATCH * PATCH
BS = BATCH * SEQ
QKV_DIM = 3 * HIDDEN


# ---------------- shared math helpers ----------------
def _layernorm(x, g, b):
    mu = jnp.mean(x, axis=-1, keepdims=True)
    var = jnp.mean(jnp.square(x - mu), axis=-1, keepdims=True)
    return (x - mu) * lax.rsqrt(var + LN_EPS) * g + b


def _gelu_tanh(x):
    # tanh-approximate GELU: tanh goes to the EUP slot (free-ish), VALU work is minimal.
    c = math.sqrt(2.0 / math.pi)
    return 0.5 * x * (1.0 + jnp.tanh(c * (x + 0.044715 * x * x * x)))


# ---------------- fused forward kernel ----------------
def _vit_forward_kernel(patches_ref, patch_w_ref, base_ref, bias_ref,
                        misc_ref, lrow_ref, lwa_ref, lw2_ref, clsw_ref,
                        o_ref):
    f32 = jnp.float32
    bf16 = jnp.bfloat16

    # ---- patch embedding + [CLS]/positional/patch-bias assembly ----
    # base rows already contain (cls+pos0) at CLS positions and (pos_i + patch_b) at
    # patch positions; patches has zero rows at CLS positions, so a single matmul adds
    # the patch embeddings exactly where they belong (no scatter matrix needed).
    x = base_ref[...] + jnp.dot(patches_ref[...], patch_w_ref[...],
                                preferred_element_type=f32)                 # (BS, H) f32

    attn_bias = bias_ref[...]                                               # (BS, BS) f32

    for li in range(NUM_LAYERS):     # static unroll, layer params stacked along dim 0
        rows = lrow_ref[li]                                                 # (8, 128) f32
        ln1_g = rows[0:1, 0:HIDDEN]
        ln1_b = rows[1:2, 0:HIDDEN]
        bqkv = rows[2:3, 0:QKV_DIM]
        bo = rows[3:4, 0:HIDDEN]
        ln2_g = rows[4:5, 0:HIDDEN]
        ln2_b = rows[5:6, 0:HIDDEN]
        b1 = rows[6:7, 0:MLP_DIM]
        b2 = rows[7:8, 0:HIDDEN]

        wa = lwa_ref[li]                                                    # (H, 256) bf16
        wqkv = wa[:, 0:QKV_DIM]                                             # (H, 3H)
        wo_l = wa[:, QKV_DIM:QKV_DIM + HIDDEN]                              # (H, H)
        w1 = wa[:, QKV_DIM + HIDDEN:QKV_DIM + HIDDEN + MLP_DIM]             # (H, MLP)
        w2 = lw2_ref[li]                                                    # (MLP, H) bf16

        # -------- multi-head self-attention on the full token slab --------
        h1 = _layernorm(x, ln1_g, ln1_b).astype(bf16)
        qkv = jnp.dot(h1, wqkv, preferred_element_type=f32) + bqkv          # (BS, 3H)
        q = qkv[:, 0:HIDDEN]
        k = qkv[:, HIDDEN:2 * HIDDEN]
        v = qkv[:, 2 * HIDDEN:3 * HIDDEN]

        # head-batched operands built as values (no VMEM scratch round-trip)
        qh = jnp.stack([q[:, h * HEAD_DIM:(h + 1) * HEAD_DIM]
                        for h in range(NUM_HEADS)], axis=0).astype(bf16)    # (NH, BS, HD)
        kh = jnp.stack([k[:, h * HEAD_DIM:(h + 1) * HEAD_DIM]
                        for h in range(NUM_HEADS)], axis=0).astype(bf16)
        vh = jnp.stack([v[:, h * HEAD_DIM:(h + 1) * HEAD_DIM]
                        for h in range(NUM_HEADS)], axis=0).astype(bf16)

        # softmax scale is folded into wq/bq at pack time; block-diagonal bias kills
        # cross-batch attention. Scores are bounded here, so no max-subtraction:
        # exp(-1e30) underflows cleanly to 0.
        scores = lax.dot_general(qh, kh, (((2,), (2,)), ((0,), (0,))),
                                 preferred_element_type=f32) + attn_bias    # (NH, BS, BS)
        e = jnp.exp(scores)
        p = e * pl.reciprocal(jnp.sum(e, axis=-1, keepdims=True), approx=True)
        ctx = lax.dot_general(p.astype(bf16), vh, (((2,), (1,)), ((0,), (0,))),
                              preferred_element_type=f32)                   # (NH, BS, HD)

        # output projection: concat-of-heads @ Wo == sum_h ctx_h @ Wo[h*hd:(h+1)*hd, :]
        attn = jnp.dot(ctx[0].astype(bf16), wo_l[0:HEAD_DIM, :],
                       preferred_element_type=f32)
        for h in range(1, NUM_HEADS):
            attn = attn + jnp.dot(ctx[h].astype(bf16),
                                  wo_l[h * HEAD_DIM:(h + 1) * HEAD_DIM, :],
                                  preferred_element_type=f32)
        x = x + attn + bo                                                   # residual 1

        # -------- MLP --------
        h2 = _layernorm(x, ln2_g, ln2_b).astype(bf16)
        m = _gelu_tanh(jnp.dot(h2, w1, preferred_element_type=f32) + b1)
        x = x + jnp.dot(m.astype(bf16), w2, preferred_element_type=f32) + b2  # residual 2

    # ---- final LayerNorm on CLS rows + classifier ----
    # CLS rows are static sublane slices; pad to 8 rows so the output store is a full
    # unmasked (8, 128) tile. Zero rows stay finite through LN (0 * rsqrt(eps) = 0).
    cls_rows = jnp.concatenate(
        [x[b * SEQ:b * SEQ + 1, :] for b in range(BATCH)]
        + [jnp.zeros((OUT_ROWS - BATCH, HIDDEN), f32)], axis=0)             # (8, H)
    ln_f_g = misc_ref[0:1, 0:HIDDEN]
    ln_f_b = misc_ref[1:2, 0:HIDDEN]
    cls_b = misc_ref[2:3, :]                                                # (1, 128)
    cls_n = _layernorm(cls_rows, ln_f_g, ln_f_b)
    o_ref[...] = jnp.dot(cls_n.astype(bf16), clsw_ref[...],
                         preferred_element_type=f32) + cls_b                # (8, 128)


# ---------------- glue ----------------
def patchify(x):
    # NCHW -> (B, num_patches, C*P*P), flattened in (c, ph, pw) order (Conv2d layout).
    B, C, H, W = x.shape
    gh, gw = H // PATCH, W // PATCH
    x = x.reshape(B, C, gh, PATCH, gw, PATCH)
    x = x.transpose(0, 2, 4, 1, 3, 5)
    return x.reshape(B, gh * gw, C * PATCH * PATCH)


def prepare_params(params):
    """One-time host-side packing (hoisted out of the per-call path)."""
    scale = 1.0 / math.sqrt(HEAD_DIM)

    # fused QKV weight/bias with the softmax scale folded into the Q part
    wqkv = jnp.concatenate([params["wq"] * scale, params["wk"], params["wv"]], axis=-1)
    bqkv = jnp.concatenate([params["bq"] * scale, params["bk"], params["bv"]], axis=-1)

    def pad_row(r):  # (L, 1, w) -> (L, 1, 128)
        return jnp.pad(r, ((0, 0), (0, 0), (0, 128 - r.shape[-1])))

    layer_rows = jnp.concatenate(
        [pad_row(params["ln1_g"]), pad_row(params["ln1_b"]),
         pad_row(bqkv), pad_row(params["bo"]),
         pad_row(params["ln2_g"]), pad_row(params["ln2_b"]),
         pad_row(params["b1"]), pad_row(params["b2"])], axis=1)             # (L, 8, 128)

    layer_wa = jnp.concatenate([wqkv, params["wo"], params["w1"]],
                               axis=-1).astype(jnp.bfloat16)                # (L, H, 256)
    layer_w2 = params["w2"].astype(jnp.bfloat16)                            # (L, MLP, H)

    misc = jnp.zeros((8, 128), jnp.float32)
    misc = misc.at[0, :HIDDEN].set(params["ln_f_g"][0])
    misc = misc.at[1, :HIDDEN].set(params["ln_f_b"][0])
    misc = misc.at[2, :NUM_CLASSES].set(params["cls_b"][0])

    cls_w = jnp.pad(params["cls_w"],
                    ((0, 0), (0, CLS_PAD - NUM_CLASSES))).astype(jnp.bfloat16)

    # base rows: CLS rows = cls_token + pos[0]; patch rows = pos[1+i] + patch_bias
    rows = jnp.concatenate([params["cls_token"] + params["pos_embed"][0:1],
                            params["pos_embed"][1:] + params["patch_b"]], axis=0)
    base = jnp.tile(rows, (BATCH, 1))                                       # (BS, H)

    # block-diagonal attention bias (2-D, broadcast over heads in-kernel)
    grp = np.arange(BS) // SEQ
    bias2d = jnp.asarray(
        np.where(grp[:, None] == grp[None, :], 0.0, -1e30).astype(np.float32))

    return {"patch_w": params["patch_w"].astype(jnp.bfloat16),
            "base": base, "bias2d": bias2d, "misc": misc,
            "layer_rows": layer_rows, "layer_wa": layer_wa,
            "layer_w2": layer_w2, "cls_w": cls_w}


@jax.jit
def vit_forward(packed, x):
    B = x.shape[0]
    patches = patchify(x)                                                   # (B, NP, D)
    # insert a zero row at each CLS position -> (B*SEQ, D); bf16 halves the DMA
    patches_full = jnp.pad(patches, ((0, 0), (1, 0), (0, 0)))
    patches_full = patches_full.reshape(B * SEQ, PATCH_DIM).astype(jnp.bfloat16)

    args = (patches_full, packed["patch_w"], packed["base"], packed["bias2d"],
            packed["misc"], packed["layer_rows"], packed["layer_wa"],
            packed["layer_w2"], packed["cls_w"])

    out_padded = pl.pallas_call(
        _vit_forward_kernel,
        in_specs=[pl.BlockSpec(memory_space=pltpu.MemorySpace.VMEM) for _ in args],
        out_specs=pl.BlockSpec(memory_space=pltpu.MemorySpace.VMEM),
        out_shape=jax.ShapeDtypeStruct((OUT_ROWS, CLS_PAD), jnp.float32),
    )(*args)
    return out_padded[:B, :NUM_CLASSES]


def init_params(key):
    # Deterministic synthetic weights (no checkpoint load). Per-layer weights stacked
    # along a leading layer dim; biases / LN params stored as (1, N) rows.
    keys = iter(jax.random.split(key, 64))

    def nrm(shape, std=0.02):
        return std * jax.random.normal(next(keys), shape, jnp.float32)

    def stacked(shape):
        return nrm((NUM_LAYERS,) + shape)

    return {
        "patch_w": nrm((PATCH_DIM, HIDDEN)),
        "patch_b": nrm((1, HIDDEN)),
        "cls_token": nrm((1, HIDDEN)),
        "pos_embed": nrm((SEQ, HIDDEN)),
        "ln_f_g": jnp.ones((1, HIDDEN), jnp.float32),
        "ln_f_b": jnp.zeros((1, HIDDEN), jnp.float32),
        "cls_w": nrm((HIDDEN, NUM_CLASSES)),
        "cls_b": nrm((1, NUM_CLASSES)),
        "ln1_g": jnp.ones((NUM_LAYERS, 1, HIDDEN), jnp.float32),
        "ln1_b": jnp.zeros((NUM_LAYERS, 1, HIDDEN), jnp.float32),
        "wq": stacked((HIDDEN, HIDDEN)), "bq": stacked((1, HIDDEN)),
        "wk": stacked((HIDDEN, HIDDEN)), "bk": stacked((1, HIDDEN)),
        "wv": stacked((HIDDEN, HIDDEN)), "bv": stacked((1, HIDDEN)),
        "wo": stacked((HIDDEN, HIDDEN)), "bo": stacked((1, HIDDEN)),
        "ln2_g": jnp.ones((NUM_LAYERS, 1, HIDDEN), jnp.float32),
        "ln2_b": jnp.zeros((NUM_LAYERS, 1, HIDDEN), jnp.float32),
        "w1": stacked((HIDDEN, MLP_DIM)), "b1": stacked((1, MLP_DIM)),
        "w2": stacked((MLP_DIM, HIDDEN)), "b2": stacked((1, HIDDEN)),
    }


# ---------------- pure-JAX reference (f32, exact GELU, no Pallas) ----------------
def reference_forward(params, x):
    B = x.shape[0]
    patches = patchify(x).reshape(B * NUM_PATCHES, PATCH_DIM)
    h = (patches @ params["patch_w"] + params["patch_b"]).reshape(B, NUM_PATCHES, HIDDEN)
    cls = jnp.broadcast_to(params["cls_token"][None], (B, 1, HIDDEN))
    h = jnp.concatenate([cls, h], axis=1) + params["pos_embed"][None]
    for li in range(NUM_LAYERS):
        h1 = _layernorm(h, params["ln1_g"][li], params["ln1_b"][li])
        q = (h1 @ params["wq"][li] + params["bq"][li]).reshape(B, SEQ, NUM_HEADS, HEAD_DIM).transpose(0, 2, 1, 3)
        k = (h1 @ params["wk"][li] + params["bk"][li]).reshape(B, SEQ, NUM_HEADS, HEAD_DIM).transpose(0, 2, 1, 3)
        v = (h1 @ params["wv"][li] + params["bv"][li]).reshape(B, SEQ, NUM_HEADS, HEAD_DIM).transpose(0, 2, 1, 3)
        scores = jnp.einsum("bhqd,bhkd->bhqk", q, k) / math.sqrt(HEAD_DIM)
        p = jax.nn.softmax(scores, axis=-1)
        ctx = jnp.einsum("bhqk,bhkd->bhqd", p, v).transpose(0, 2, 1, 3).reshape(B, SEQ, HIDDEN)
        x1 = h + ctx @ params["wo"][li] + params["bo"][li]
        h2 = _layernorm(x1, params["ln2_g"][li], params["ln2_b"][li])
        h = x1 + jax.nn.gelu(h2 @ params["w1"][li] + params["b1"][li],
                             approximate=False) @ params["w2"][li] + params["b2"][li]
    cls_out = _layernorm(h, params["ln_f_g"], params["ln_f_b"])[:, 0, :]
    return cls_out @ params["cls_w"] + params["cls_b"]


if __name__ == "__main__":
    key = jax.random.PRNGKey(0)
    pkey, xkey = jax.random.split(key)
    params = init_params(pkey)
    packed = prepare_params(params)          # one-time packing, outside the call path
    x = jax.random.normal(xkey, (BATCH, CHANNELS, IMG, IMG), jnp.float32)

    logits = jax.block_until_ready(vit_forward(packed, x))

    ref = reference_forward(params, x)
    assert logits.shape == (BATCH, NUM_CLASSES)
    assert bool(jnp.allclose(logits, ref, atol=1e-2, rtol=1e-2)), (logits, ref)
    print("KERNEL_OK")
</pallas_src>

<mosaic_0001>
module attributes {stable_mosaic.version = 11 : i64} {
  func.func @_vit_forward_kernel(%arg0: memref<10x192xbf16, #tpu.memory_space<vmem>>, %arg1: memref<192x32xbf16, #tpu.memory_space<vmem>>, %arg2: memref<10x32xf32, #tpu.memory_space<vmem>>, %arg3: memref<10x10xf32, #tpu.memory_space<vmem>>, %arg4: memref<8x128xf32, #tpu.memory_space<vmem>>, %arg5: memref<2x8x128xf32, #tpu.memory_space<vmem>>, %arg6: memref<2x32x256xbf16, #tpu.memory_space<vmem>>, %arg7: memref<2x128x32xbf16, #tpu.memory_space<vmem>>, %arg8: memref<32x128xbf16, #tpu.memory_space<vmem>>, %arg9: memref<8x128xf32, #tpu.memory_space<vmem>>) attributes {dimension_semantics = [], scalar_prefetch = 0 : i64, scratch_operands = 0 : i64, tpu.core_type = #tpu.core_type<tc>} {
    %c0 = arith.constant 0 : index
    %c0_0 = arith.constant 0 : index
    %0 = vector.load %arg2[%c0, %c0_0] : memref<10x32xf32, #tpu.memory_space<vmem>>, vector<10x32xf32>
    %c0_1 = arith.constant 0 : index
    %c0_2 = arith.constant 0 : index
    %1 = vector.load %arg0[%c0_1, %c0_2] : memref<10x192xbf16, #tpu.memory_space<vmem>>, vector<10x192xbf16>
    %c0_3 = arith.constant 0 : index
    %c0_4 = arith.constant 0 : index
    %2 = vector.load %arg1[%c0_3, %c0_4] : memref<192x32xbf16, #tpu.memory_space<vmem>>, vector<192x32xbf16>
    %cst = arith.constant dense<0.000000e+00> : vector<10x32xf32>
    %3 = tpu.matmul %1, %2, %cst {dimension_numbers = #tpu.dot_dimension_numbers<[1], [0], [0], [1], [0, 0, 1, 1], [], []>} : vector<10x192xbf16>, vector<192x32xbf16>, vector<10x32xf32> -> vector<10x32xf32>
    %4 = arith.addf %0, %3 : vector<10x32xf32>
    %c0_5 = arith.constant 0 : index
    %c0_6 = arith.constant 0 : index
    %5 = vector.load %arg3[%c0_5, %c0_6] : memref<10x10xf32, #tpu.memory_space<vmem>>, vector<10x10xf32>
    %c0_7 = arith.constant 0 : index
    %c0_8 = arith.constant 0 : index
    %c0_9 = arith.constant 0 : index
    %6 = vector.load %arg5[%c0_7, %c0_8, %c0_9] : memref<2x8x128xf32, #tpu.memory_space<vmem>>, vector<1x8x128xf32>
    %7 = vector.shape_cast %6 : vector<1x8x128xf32> to vector<8x128xf32>
    %8 = vector.extract_strided_slice %7 {offsets = [0, 0], sizes = [1, 32], strides = [1, 1]} : vector<8x128xf32> to vector<1x32xf32>
    %9 = vector.extract_strided_slice %7 {offsets = [1, 0], sizes = [1, 32], strides = [1, 1]} : vector<8x128xf32> to vector<1x32xf32>
    %10 = vector.extract_strided_slice %7 {offsets = [2, 0], sizes = [1, 96], strides = [1, 1]} : vector<8x128xf32> to vector<1x96xf32>
    %11 = vector.extract_strided_slice %7 {offsets = [3, 0], sizes = [1, 32], strides = [1, 1]} : vector<8x128xf32> to vector<1x32xf32>
    %12 = vector.extract_strided_slice %7 {offsets = [4, 0], sizes = [1, 32], strides = [1, 1]} : vector<8x128xf32> to vector<1x32xf32>
    %13 = vector.extract_strided_slice %7 {offsets = [5, 0], sizes = [1, 32], strides = [1, 1]} : vector<8x128xf32> to vector<1x32xf32>
    %14 = vector.extract_strided_slice %7 {offsets = [6, 0], sizes = [1, 128], strides = [1, 1]} : vector<8x128xf32> to vector<1x128xf32>
    %15 = vector.extract_strided_slice %7 {offsets = [7, 0], sizes = [1, 32], strides = [1, 1]} : vector<8x128xf32> to vector<1x32xf32>
    %c0_10 = arith.constant 0 : index
    %c0_11 = arith.constant 0 : index
    %c0_12 = arith.constant 0 : index
    %16 = vector.load %arg6[%c0_10, %c0_11, %c0_12] : memref<2x32x256xbf16, #tpu.memory_space<vmem>>, vector<1x32x256xbf16>
    %17 = vector.shape_cast %16 : vector<1x32x256xbf16> to vector<32x256xbf16>
    %18 = vector.extract_strided_slice %17 {offsets = [0, 0], sizes = [32, 96], strides = [1, 1]} : vector<32x256xbf16> to vector<32x96xbf16>
    %19 = vector.extract_strided_slice %17 {offsets = [0, 96], sizes = [32, 32], strides = [1, 1]} : vector<32x256xbf16> to vector<32x32xbf16>
    %20 = vector.extract_strided_slice %17 {offsets = [0, 128], sizes = [32, 128], strides = [1, 1]} : vector<32x256xbf16> to vector<32x128xbf16>
    %c0_13 = arith.constant 0 : index
    %c0_14 = arith.constant 0 : index
    %c0_15 = arith.constant 0 : index
    %21 = vector.load %arg7[%c0_13, %c0_14, %c0_15] : memref<2x128x32xbf16, #tpu.memory_space<vmem>>, vector<1x128x32xbf16>
    %22 = vector.shape_cast %21 : vector<1x128x32xbf16> to vector<128x32xbf16>
    %cst_16 = arith.constant dense<0.000000e+00> : vector<10xf32>
    %23 = vector.multi_reduction <add>, %4, %cst_16 [1] : vector<10x32xf32> to vector<10xf32>
    %24 = vector.shape_cast %23 : vector<10xf32> to vector<10x1xf32>
    %cst_17 = arith.constant 3.200000e+01 : f32
    %25 = vector.broadcast %cst_17 : f32 to vector<10x1xf32>
    %26 = arith.divf %24, %25 : vector<10x1xf32>
    %27 = vector.broadcast %26 : vector<10x1xf32> to vector<10x32xf32>
    %28 = arith.subf %4, %27 : vector<10x32xf32>
    %29 = arith.mulf %28, %28 : vector<10x32xf32>
    %cst_18 = arith.constant dense<0.000000e+00> : vector<10xf32>
    %30 = vector.multi_reduction <add>, %29, %cst_18 [1] : vector<10x32xf32> to vector<10xf32>
    %31 = vector.shape_cast %30 : vector<10xf32> to vector<10x1xf32>
    %cst_19 = arith.constant 3.200000e+01 : f32
    %32 = vector.broadcast %cst_19 : f32 to vector<10x1xf32>
    %33 = arith.divf %31, %32 : vector<10x1xf32>
    %34 = vector.broadcast %26 : vector<10x1xf32> to vector<10x32xf32>
    %35 = arith.subf %4, %34 : vector<10x32xf32>
    %cst_20 = arith.constant 9.99999996E-13 : f32
    %36 = vector.broadcast %cst_20 : f32 to vector<10x1xf32>
    %37 = arith.addf %33, %36 : vector<10x1xf32>
    %38 = math.rsqrt %37 : vector<10x1xf32>
    %39 = vector.broadcast %38 : vector<10x1xf32> to vector<10x32xf32>
    %40 = arith.mulf %35, %39 : vector<10x32xf32>
    %41 = vector.broadcast %8 : vector<1x32xf32> to vector<10x32xf32>
    %42 = arith.mulf %40, %41 : vector<10x32xf32>
    %43 = vector.broadcast %9 : vector<1x32xf32> to vector<10x32xf32>
    %44 = arith.addf %42, %43 : vector<10x32xf32>
    %45 = arith.truncf %44 : vector<10x32xf32> to vector<10x32xbf16>
    %cst_21 = arith.constant dense<0.000000e+00> : vector<10x96xf32>
    %46 = tpu.matmul %45, %18, %cst_21 {dimension_numbers = #tpu.dot_dimension_numbers<[1], [0], [0], [1], [0, 0, 1, 1], [], []>} : vector<10x32xbf16>, vector<32x96xbf16>, vector<10x96xf32> -> vector<10x96xf32>
    %47 = vector.broadcast %10 : vector<1x96xf32> to vector<10x96xf32>
    %48 = arith.addf %46, %47 : vector<10x96xf32>
    %49 = vector.extract_strided_slice %48 {offsets = [0, 0], sizes = [10, 32], strides = [1, 1]} : vector<10x96xf32> to vector<10x32xf32>
    %50 = vector.extract_strided_slice %48 {offsets = [0, 32], sizes = [10, 32], strides = [1, 1]} : vector<10x96xf32> to vector<10x32xf32>
    %51 = vector.extract_strided_slice %48 {offsets = [0, 64], sizes = [10, 32], strides = [1, 1]} : vector<10x96xf32> to vector<10x32xf32>
    %52 = vector.extract_strided_slice %49 {offsets = [0, 0], sizes = [10, 16], strides = [1, 1]} : vector<10x32xf32> to vector<10x16xf32>
    %53 = vector.extract_strided_slice %49 {offsets = [0, 16], sizes = [10, 16], strides = [1, 1]} : vector<10x32xf32> to vector<10x16xf32>
    %54 = vector.shape_cast %52 : vector<10x16xf32> to vector<1x10x16xf32>
    %55 = vector.shape_cast %53 : vector<10x16xf32> to vector<1x10x16xf32>
    %56 = tpu.concatenate %54, %55 in 0 : vector<1x10x16xf32>, vector<1x10x16xf32> -> vector<2x10x16xf32>
    %57 = arith.truncf %56 : vector<2x10x16xf32> to vector<2x10x16xbf16>
    %58 = vector.extract_strided_slice %50 {offsets = [0, 0], sizes = [10, 16], strides = [1, 1]} : vector<10x32xf32> to vector<10x16xf32>
    %59 = vector.extract_strided_slice %50 {offsets = [0, 16], sizes = [10, 16], strides = [1, 1]} : vector<10x32xf32> to vector<10x16xf32>
    %60 = vector.shape_cast %58 : vector<10x16xf32> to vector<1x10x16xf32>
    %61 = vector.shape_cast %59 : vector<10x16xf32> to vector<1x10x16xf32>
    %62 = tpu.concatenate %60, %61 in 0 : vector<1x10x16xf32>, vector<1x10x16xf32> -> vector<2x10x16xf32>
    %63 = arith.truncf %62 : vector<2x10x16xf32> to vector<2x10x16xbf16>
    %64 = vector.extract_strided_slice %51 {offsets = [0, 0], sizes = [10, 16], strides = [1, 1]} : vector<10x32xf32> to vector<10x16xf32>
    %65 = vector.extract_strided_slice %51 {offsets = [0, 16], sizes = [10, 16], strides = [1, 1]} : vector<10x32xf32> to vector<10x16xf32>
    %66 = vector.shape_cast %64 : vector<10x16xf32> to vector<1x10x16xf32>
    %67 = vector.shape_cast %65 : vector<10x16xf32> to vector<1x10x16xf32>
    %68 = tpu.concatenate %66, %67 in 0 : vector<1x10x16xf32>, vector<1x10x16xf32> -> vector<2x10x16xf32>
    %69 = arith.truncf %68 : vector<2x10x16xf32> to vector<2x10x16xbf16>
    %cst_22 = arith.constant dense<0.000000e+00> : vector<2x10x10xf32>
    %70 = tpu.matmul %57, %63, %cst_22 {dimension_numbers = #tpu.dot_dimension_numbers<[2], [2], [1], [1], [0, 0, 0, 1, 1, 1], [0], [0]>} : vector<2x10x16xbf16>, vector<2x10x16xbf16>, vector<2x10x10xf32> -> vector<2x10x10xf32>
    %71 = vector.shape_cast %5 : vector<10x10xf32> to vector<1x10x10xf32>
    %72 = vector.broadcast %71 : vector<1x10x10xf32> to vector<2x10x10xf32>
    %73 = arith.addf %70, %72 : vector<2x10x10xf32>
    %74 = math.exp %73 : vector<2x10x10xf32>
    %cst_23 = arith.constant dense<0.000000e+00> : vector<2x10xf32>
    %75 = vector.multi_reduction <add>, %74, %cst_23 [2] : vector<2x10x10xf32> to vector<2x10xf32>
    %76 = vector.shape_cast %75 : vector<2x10xf32> to vector<2x10x1xf32>
    %77 = tpu.reciprocal %76 {approx = true} : vector<2x10x1xf32> -> vector<2x10x1xf32>
    %78 = vector.broadcast %77 : vector<2x10x1xf32> to vector<2x10x10xf32>
    %79 = arith.mulf %74, %78 : vector<2x10x10xf32>
    %80 = arith.truncf %79 : vector<2x10x10xf32> to vector<2x10x10xbf16>
    %cst_24 = arith.constant dense<0.000000e+00> : vector<2x10x16xf32>
    %81 = tpu.matmul %80, %69, %cst_24 {dimension_numbers = #tpu.dot_dimension_numbers<[2], [1], [1], [2], [0, 0, 0, 1, 1, 2], [0], [0]>} : vector<2x10x10xbf16>, vector<2x10x16xbf16>, vector<2x10x16xf32> -> vector<2x10x16xf32>
    %82 = vector.extract_strided_slice %81 {offsets = [0, 0, 0], sizes = [1, 10, 16], strides = [1, 1, 1]} : vector<2x10x16xf32> to vector<1x10x16xf32>
    %83 = vector.shape_cast %82 : vector<1x10x16xf32> to vector<10x16xf32>
    %84 = arith.truncf %83 : vector<10x16xf32> to vector<10x16xbf16>
    %85 = vector.extract_strided_slice %19 {offsets = [0, 0], sizes = [16, 32], strides = [1, 1]} : vector<32x32xbf16> to vector<16x32xbf16>
    %cst_25 = arith.constant dense<0.000000e+00> : vector<10x32xf32>
    %86 = tpu.matmul %84, %85, %cst_25 {dimension_numbers = #tpu.dot_dimension_numbers<[1], [0], [0], [1], [0, 0, 1, 1], [], []>} : vector<10x16xbf16>, vector<16x32xbf16>, vector<10x32xf32> -> vector<10x32xf32>
    %87 = vector.extract_strided_slice %81 {offsets = [1, 0, 0], sizes = [1, 10, 16], strides = [1, 1, 1]} : vector<2x10x16xf32> to vector<1x10x16xf32>
    %88 = vector.shape_cast %87 : vector<1x10x16xf32> to vector<10x16xf32>
    %89 = arith.truncf %88 : vector<10x16xf32> to vector<10x16xbf16>
    %90 = vector.extract_strided_slice %19 {offsets = [16, 0], sizes = [16, 32], strides = [1, 1]} : vector<32x32xbf16> to vector<16x32xbf16>
    %cst_26 = arith.constant dense<0.000000e+00> : vector<10x32xf32>
    %91 = tpu.matmul %89, %90, %cst_26 {dimension_numbers = #tpu.dot_dimension_numbers<[1], [0], [0], [1], [0, 0, 1, 1], [], []>} : vector<10x16xbf16>, vector<16x32xbf16>, vector<10x32xf32> -> vector<10x32xf32>
    %92 = arith.addf %86, %91 : vector<10x32xf32>
    %93 = arith.addf %4, %92 : vector<10x32xf32>
    %94 = vector.broadcast %11 : vector<1x32xf32> to vector<10x32xf32>
    %95 = arith.addf %93, %94 : vector<10x32xf32>
    %cst_27 = arith.constant dense<0.000000e+00> : vector<10xf32>
    %96 = vector.multi_reduction <add>, %95, %cst_27 [1] : vector<10x32xf32> to vector<10xf32>
    %97 = vector.shape_cast %96 : vector<10xf32> to vector<10x1xf32>
    %cst_28 = arith.constant 3.200000e+01 : f32
    %98 = vector.broadcast %cst_28 : f32 to vector<10x1xf32>
    %99 = arith.divf %97, %98 : vector<10x1xf32>
    %100 = vector.broadcast %99 : vector<10x1xf32> to vector<10x32xf32>
    %101 = arith.subf %95, %100 : vector<10x32xf32>
    %102 = arith.mulf %101, %101 : vector<10x32xf32>
    %cst_29 = arith.constant dense<0.000000e+00> : vector<10xf32>
    %103 = vector.multi_reduction <add>, %102, %cst_29 [1] : vector<10x32xf32> to vector<10xf32>
    %104 = vector.shape_cast %103 : vector<10xf32> to vector<10x1xf32>
    %cst_30 = arith.constant 3.200000e+01 : f32
    %105 = vector.broadcast %cst_30 : f32 to vector<10x1xf32>
    %106 = arith.divf %104, %105 : vector<10x1xf32>
    %107 = vector.broadcast %99 : vector<10x1xf32> to vector<10x32xf32>
    %108 = arith.subf %95, %107 : vector<10x32xf32>
    %cst_31 = arith.constant 9.99999996E-13 : f32
    %109 = vector.broadcast %cst_31 : f32 to vector<10x1xf32>
    %110 = arith.addf %106, %109 : vector<10x1xf32>
    %111 = math.rsqrt %110 : vector<10x1xf32>
    %112 = vector.broadcast %111 : vector<10x1xf32> to vector<10x32xf32>
    %113 = arith.mulf %108, %112 : vector<10x32xf32>
    %114 = vector.broadcast %12 : vector<1x32xf32> to vector<10x32xf32>
    %115 = arith.mulf %113, %114 : vector<10x32xf32>
    %116 = vector.broadcast %13 : vector<1x32xf32> to vector<10x32xf32>
    %117 = arith.addf %115, %116 : vector<10x32xf32>
    %118 = arith.truncf %117 : vector<10x32xf32> to vector<10x32xbf16>
    %cst_32 = arith.constant dense<0.000000e+00> : vector<10x128xf32>
    %119 = tpu.matmul %118, %20, %cst_32 {dimension_numbers = #tpu.dot_dimension_numbers<[1], [0], [0], [1], [0, 0, 1, 1], [], []>} : vector<10x32xbf16>, vector<32x128xbf16>, vector<10x128xf32> -> vector<10x128xf32>
    %120 = vector.broadcast %14 : vector<1x128xf32> to vector<10x128xf32>
    %121 = arith.addf %119, %120 : vector<10x128xf32>
    %cst_33 = arith.constant 5.000000e-01 : f32
    %122 = vector.broadcast %cst_33 : f32 to vector<10x128xf32>
    %123 = arith.mulf %122, %121 : vector<10x128xf32>
    %cst_34 = arith.constant 4.471500e-02 : f32
    %124 = vector.broadcast %cst_34 : f32 to vector<10x128xf32>
    %125 = arith.mulf %124, %121 : vector<10x128xf32>
    %126 = arith.mulf %125, %121 : vector<10x128xf32>
    %127 = arith.mulf %126, %121 : vector<10x128xf32>
    %128 = arith.addf %121, %127 : vector<10x128xf32>
    %cst_35 = arith.constant 0.797884583 : f32
    %129 = vector.broadcast %cst_35 : f32 to vector<10x128xf32>
    %130 = arith.mulf %129, %128 : vector<10x128xf32>
    %131 = math.tanh %130 : vector<10x128xf32>
    %cst_36 = arith.constant 1.000000e+00 : f32
    %132 = vector.broadcast %cst_36 : f32 to vector<10x128xf32>
    %133 = arith.addf %132, %131 : vector<10x128xf32>
    %134 = arith.mulf %123, %133 : vector<10x128xf32>
    %135 = arith.truncf %134 : vector<10x128xf32> to vector<10x128xbf16>
    %cst_37 = arith.constant dense<0.000000e+00> : vector<10x32xf32>
    %136 = tpu.matmul %135, %22, %cst_37 {dimension_numbers = #tpu.dot_dimension_numbers<[1], [0], [0], [1], [0, 0, 1, 1], [], []>} : vector<10x128xbf16>, vector<128x32xbf16>, vector<10x32xf32> -> vector<10x32xf32>
    %137 = arith.addf %95, %136 : vector<10x32xf32>
    %138 = vector.broadcast %15 : vector<1x32xf32> to vector<10x32xf32>
    %139 = arith.addf %137, %138 : vector<10x32xf32>
    %c1 = arith.constant 1 : index
    %c0_38 = arith.constant 0 : index
    %c0_39 = arith.constant 0 : index
    %140 = vector.load %arg5[%c1, %c0_38, %c0_39] : memref<2x8x128xf32, #tpu.memory_space<vmem>>, vector<1x8x128xf32>
    %141 = vector.shape_cast %140 : vector<1x8x128xf32> to vector<8x128xf32>
    %142 = vector.extract_strided_slice %141 {offsets = [0, 0], sizes = [1, 32], strides = [1, 1]} : vector<8x128xf32> to vector<1x32xf32>
    %143 = vector.extract_strided_slice %141 {offsets = [1, 0], sizes = [1, 32], strides = [1, 1]} : vector<8x128xf32> to vector<1x32xf32>
    %144 = vector.extract_strided_slice %141 {offsets = [2, 0], sizes = [1, 96], strides = [1, 1]} : vector<8x128xf32> to vector<1x96xf32>
    %145 = vector.extract_strided_slice %141 {offsets = [3, 0], sizes = [1, 32], strides = [1, 1]} : vector<8x128xf32> to vector<1x32xf32>
    %146 = vector.extract_strided_slice %141 {offsets = [4, 0], sizes = [1, 32], strides = [1, 1]} : vector<8x128xf32> to vector<1x32xf32>
    %147 = vector.extract_strided_slice %141 {offsets = [5, 0], sizes = [1, 32], strides = [1, 1]} : vector<8x128xf32> to vector<1x32xf32>
    %148 = vector.extract_strided_slice %141 {offsets = [6, 0], sizes = [1, 128], strides = [1, 1]} : vector<8x128xf32> to vector<1x128xf32>
    %149 = vector.extract_strided_slice %141 {offsets = [7, 0], sizes = [1, 32], strides = [1, 1]} : vector<8x128xf32> to vector<1x32xf32>
    %c1_40 = arith.constant 1 : index
    %c0_41 = arith.constant 0 : index
    %c0_42 = arith.constant 0 : index
    %150 = vector.load %arg6[%c1_40, %c0_41, %c0_42] : memref<2x32x256xbf16, #tpu.memory_space<vmem>>, vector<1x32x256xbf16>
    %151 = vector.shape_cast %150 : vector<1x32x256xbf16> to vector<32x256xbf16>
    %152 = vector.extract_strided_slice %151 {offsets = [0, 0], sizes = [32, 96], strides = [1, 1]} : vector<32x256xbf16> to vector<32x96xbf16>
    %153 = vector.extract_strided_slice %151 {offsets = [0, 96], sizes = [32, 32], strides = [1, 1]} : vector<32x256xbf16> to vector<32x32xbf16>
    %154 = vector.extract_strided_slice %151 {offsets = [0, 128], sizes = [32, 128], strides = [1, 1]} : vector<32x256xbf16> to vector<32x128xbf16>
    %c1_43 = arith.constant 1 : index
    %c0_44 = arith.constant 0 : index
    %c0_45 = arith.constant 0 : index
    %155 = vector.load %arg7[%c1_43, %c0_44, %c0_45] : memref<2x128x32xbf16, #tpu.memory_space<vmem>>, vector<1x128x32xbf16>
    %156 = vector.shape_cast %155 : vector<1x128x32xbf16> to vector<128x32xbf16>
    %cst_46 = arith.constant dense<0.000000e+00> : vector<10xf32>
    %157 = vector.multi_reduction <add>, %139, %cst_46 [1] : vector<10x32xf32> to vector<10xf32>
    %158 = vector.shape_cast %157 : vector<10xf32> to vector<10x1xf32>
    %cst_47 = arith.constant 3.200000e+01 : f32
    %159 = vector.broadcast %cst_47 : f32 to vector<10x1xf32>
    %160 = arith.divf %158, %159 : vector<10x1xf32>
    %161 = vector.broadcast %160 : vector<10x1xf32> to vector<10x32xf32>
    %162 = arith.subf %139, %161 : vector<10x32xf32>
    %163 = arith.mulf %162, %162 : vector<10x32xf32>
    %cst_48 = arith.constant dense<0.000000e+00> : vector<10xf32>
    %164 = vector.multi_reduction <add>, %163, %cst_48 [1] : vector<10x32xf32> to vector<10xf32>
    %165 = vector.shape_cast %164 : vector<10xf32> to vector<10x1xf32>
    %cst_49 = arith.constant 3.200000e+01 : f32
    %166 = vector.broadcast %cst_49 : f32 to vector<10x1xf32>
    %167 = arith.divf %165, %166 : vector<10x1xf32>
    %168 = vector.broadcast %160 : vector<10x1xf32> to vector<10x32xf32>
    %169 = arith.subf %139, %168 : vector<10x32xf32>
    %cst_50 = arith.constant 9.99999996E-13 : f32
    %170 = vector.broadcast %cst_50 : f32 to vector<10x1xf32>
    %171 = arith.addf %167, %170 : vector<10x1xf32>
    %172 = math.rsqrt %171 : vector<10x1xf32>
    %173 = vector.broadcast %172 : vector<10x1xf32> to vector<10x32xf32>
    %174 = arith.mulf %169, %173 : vector<10x32xf32>
    %175 = vector.broadcast %142 : vector<1x32xf32> to vector<10x32xf32>
    %176 = arith.mulf %174, %175 : vector<10x32xf32>
    %177 = vector.broadcast %143 : vector<1x32xf32> to vector<10x32xf32>
    %178 = arith.addf %176, %177 : vector<10x32xf32>
    %179 = arith.truncf %178 : vector<10x32xf32> to vector<10x32xbf16>
    %cst_51 = arith.constant dense<0.000000e+00> : vector<10x96xf32>
    %180 = tpu.matmul %179, %152, %cst_51 {dimension_numbers = #tpu.dot_dimension_numbers<[1], [0], [0], [1], [0, 0, 1, 1], [], []>} : vector<10x32xbf16>, vector<32x96xbf16>, vector<10x96xf32> -> vector<10x96xf32>
    %181 = vector.broadcast %144 : vector<1x96xf32> to vector<10x96xf32>
    %182 = arith.addf %180, %181 : vector<10x96xf32>
    %183 = vector.extract_strided_slice %182 {offsets = [0, 0], sizes = [10, 32], strides = [1, 1]} : vector<10x96xf32> to vector<10x32xf32>
    %184 = vector.extract_strided_slice %182 {offsets = [0, 32], sizes = [10, 32], strides = [1, 1]} : vector<10x96xf32> to vector<10x32xf32>
    %185 = vector.extract_strided_slice %182 {offsets = [0, 64], sizes = [10, 32], strides = [1, 1]} : vector<10x96xf32> to vector<10x32xf32>
    %186 = vector.extract_strided_slice %183 {offsets = [0, 0], sizes = [10, 16], strides = [1, 1]} : vector<10x32xf32> to vector<10x16xf32>
    %187 = vector.extract_strided_slice %183 {offsets = [0, 16], sizes = [10, 16], strides = [1, 1]} : vector<10x32xf32> to vector<10x16xf32>
    %188 = vector.shape_cast %186 : vector<10x16xf32> to vector<1x10x16xf32>
    %189 = vector.shape_cast %187 : vector<10x16xf32> to vector<1x10x16xf32>
    %190 = tpu.concatenate %188, %189 in 0 : vector<1x10x16xf32>, vector<1x10x16xf32> -> vector<2x10x16xf32>
    %191 = arith.truncf %190 : vector<2x10x16xf32> to vector<2x10x16xbf16>
    %192 = vector.extract_strided_slice %184 {offsets = [0, 0], sizes = [10, 16], strides = [1, 1]} : vector<10x32xf32> to vector<10x16xf32>
    %193 = vector.extract_strided_slice %184 {offsets = [0, 16], sizes = [10, 16], strides = [1, 1]} : vector<10x32xf32> to vector<10x16xf32>
    %194 = vector.shape_cast %192 : vector<10x16xf32> to vector<1x10x16xf32>
    %195 = vector.shape_cast %193 : vector<10x16xf32> to vector<1x10x16xf32>
    %196 = tpu.concatenate %194, %195 in 0 : vector<1x10x16xf32>, vector<1x10x16xf32> -> vector<2x10x16xf32>
    %197 = arith.truncf %196 : vector<2x10x16xf32> to vector<2x10x16xbf16>
    %198 = vector.extract_strided_slice %185 {offsets = [0, 0], sizes = [10, 16], strides = [1, 1]} : vector<10x32xf32> to vector<10x16xf32>
    %199 = vector.extract_strided_slice %185 {offsets = [0, 16], sizes = [10, 16], strides = [1, 1]} : vector<10x32xf32> to vector<10x16xf32>
    %200 = vector.shape_cast %198 : vector<10x16xf32> to vector<1x10x16xf32>
    %201 = vector.shape_cast %199 : vector<10x16xf32> to vector<1x10x16xf32>
    %202 = tpu.concatenate %200, %201 in 0 : vector<1x10x16xf32>, vector<1x10x16xf32> -> vector<2x10x16xf32>
    %203 = arith.truncf %202 : vector<2x10x16xf32> to vector<2x10x16xbf16>
    %cst_52 = arith.constant dense<0.000000e+00> : vector<2x10x10xf32>
    %204 = tpu.matmul %191, %197, %cst_52 {dimension_numbers = #tpu.dot_dimension_numbers<[2], [2], [1], [1], [0, 0, 0, 1, 1, 1], [0], [0]>} : vector<2x10x16xbf16>, vector<2x10x16xbf16>, vector<2x10x10xf32> -> vector<2x10x10xf32>
    %205 = vector.shape_cast %5 : vector<10x10xf32> to vector<1x10x10xf32>
    %206 = vector.broadcast %205 : vector<1x10x10xf32> to vector<2x10x10xf32>
    %207 = arith.addf %204, %206 : vector<2x10x10xf32>
    %208 = math.exp %207 : vector<2x10x10xf32>
    %cst_53 = arith.constant dense<0.000000e+00> : vector<2x10xf32>
    %209 = vector.multi_reduction <add>, %208, %cst_53 [2] : vector<2x10x10xf32> to vector<2x10xf32>
    %210 = vector.shape_cast %209 : vector<2x10xf32> to vector<2x10x1xf32>
    %211 = tpu.reciprocal %210 {approx = true} : vector<2x10x1xf32> -> vector<2x10x1xf32>
    %212 = vector.broadcast %211 : vector<2x10x1xf32> to vector<2x10x10xf32>
    %213 = arith.mulf %208, %212 : vector<2x10x10xf32>
    %214 = arith.truncf %213 : vector<2x10x10xf32> to vector<2x10x10xbf16>
    %cst_54 = arith.constant dense<0.000000e+00> : vector<2x10x16xf32>
    %215 = tpu.matmul %214, %203, %cst_54 {dimension_numbers = #tpu.dot_dimension_numbers<[2], [1], [1], [2], [0, 0, 0, 1, 1, 2], [0], [0]>} : vector<2x10x10xbf16>, vector<2x10x16xbf16>, vector<2x10x16xf32> -> vector<2x10x16xf32>
    %216 = vector.extract_strided_slice %215 {offsets = [0, 0, 0], sizes = [1, 10, 16], strides = [1, 1, 1]} : vector<2x10x16xf32> to vector<1x10x16xf32>
    %217 = vector.shape_cast %216 : vector<1x10x16xf32> to vector<10x16xf32>
    %218 = arith.truncf %217 : vector<10x16xf32> to vector<10x16xbf16>
    %219 = vector.extract_strided_slice %153 {offsets = [0, 0], sizes = [16, 32], strides = [1, 1]} : vector<32x32xbf16> to vector<16x32xbf16>
    %cst_55 = arith.constant dense<0.000000e+00> : vector<10x32xf32>
    %220 = tpu.matmul %218, %219, %cst_55 {dimension_numbers = #tpu.dot_dimension_numbers<[1], [0], [0], [1], [0, 0, 1, 1], [], []>} : vector<10x16xbf16>, vector<16x32xbf16>, vector<10x32xf32> -> vector<10x32xf32>
    %221 = vector.extract_strided_slice %215 {offsets = [1, 0, 0], sizes = [1, 10, 16], strides = [1, 1, 1]} : vector<2x10x16xf32> to vector<1x10x16xf32>
    %222 = vector.shape_cast %221 : vector<1x10x16xf32> to vector<10x16xf32>
    %223 = arith.truncf %222 : vector<10x16xf32> to vector<10x16xbf16>
    %224 = vector.extract_strided_slice %153 {offsets = [16, 0], sizes = [16, 32], strides = [1, 1]} : vector<32x32xbf16> to vector<16x32xbf16>
    %cst_56 = arith.constant dense<0.000000e+00> : vector<10x32xf32>
    %225 = tpu.matmul %223, %224, %cst_56 {dimension_numbers = #tpu.dot_dimension_numbers<[1], [0], [0], [1], [0, 0, 1, 1], [], []>} : vector<10x16xbf16>, vector<16x32xbf16>, vector<10x32xf32> -> vector<10x32xf32>
    %226 = arith.addf %220, %225 : vector<10x32xf32>
    %227 = arith.addf %139, %226 : vector<10x32xf32>
    %228 = vector.broadcast %145 : vector<1x32xf32> to vector<10x32xf32>
    %229 = arith.addf %227, %228 : vector<10x32xf32>
    %cst_57 = arith.constant dense<0.000000e+00> : vector<10xf32>
    %230 = vector.multi_reduction <add>, %229, %cst_57 [1] : vector<10x32xf32> to vector<10xf32>
    %231 = vector.shape_cast %230 : vector<10xf32> to vector<10x1xf32>
    %cst_58 = arith.constant 3.200000e+01 : f32
    %232 = vector.broadcast %cst_58 : f32 to vector<10x1xf32>
    %233 = arith.divf %231, %232 : vector<10x1xf32>
    %234 = vector.broadcast %233 : vector<10x1xf32> to vector<10x32xf32>
    %235 = arith.subf %229, %234 : vector<10x32xf32>
    %236 = arith.mulf %235, %235 : vector<10x32xf32>
    %cst_59 = arith.constant dense<0.000000e+00> : vector<10xf32>
    %237 = vector.multi_reduction <add>, %236, %cst_59 [1] : vector<10x32xf32> to vector<10xf32>
    %238 = vector.shape_cast %237 : vector<10xf32> to vector<10x1xf32>
    %cst_60 = arith.constant 3.200000e+01 : f32
    %239 = vector.broadcast %cst_60 : f32 to vector<10x1xf32>
    %240 = arith.divf %238, %239 : vector<10x1xf32>
    %241 = vector.broadcast %233 : vector<10x1xf32> to vector<10x32xf32>
    %242 = arith.subf %229, %241 : vector<10x32xf32>
    %cst_61 = arith.constant 9.99999996E-13 : f32
    %243 = vector.broadcast %cst_61 : f32 to vector<10x1xf32>
    %244 = arith.addf %240, %243 : vector<10x1xf32>
    %245 = math.rsqrt %244 : vector<10x1xf32>
    %246 = vector.broadcast %245 : vector<10x1xf32> to vector<10x32xf32>
    %247 = arith.mulf %242, %246 : vector<10x32xf32>
    %248 = vector.broadcast %146 : vector<1x32xf32> to vector<10x32xf32>
    %249 = arith.mulf %247, %248 : vector<10x32xf32>
    %250 = vector.broadcast %147 : vector<1x32xf32> to vector<10x32xf32>
    %251 = arith.addf %249, %250 : vector<10x32xf32>
    %252 = arith.truncf %251 : vector<10x32xf32> to vector<10x32xbf16>
    %cst_62 = arith.constant dense<0.000000e+00> : vector<10x128xf32>
    %253 = tpu.matmul %252, %154, %cst_62 {dimension_numbers = #tpu.dot_dimension_numbers<[1], [0], [0], [1], [0, 0, 1, 1], [], []>} : vector<10x32xbf16>, vector<32x128xbf16>, vector<10x128xf32> -> vector<10x128xf32>
    %254 = vector.broadcast %148 : vector<1x128xf32> to vector<10x128xf32>
    %255 = arith.addf %253, %254 : vector<10x128xf32>
    %cst_63 = arith.constant 5.000000e-01 : f32
    %256 = vector.broadcast %cst_63 : f32 to vector<10x128xf32>
    %257 = arith.mulf %256, %255 : vector<10x128xf32>
    %cst_64 = arith.constant 4.471500e-02 : f32
    %258 = vector.broadcast %cst_64 : f32 to vector<10x128xf32>
    %259 = arith.mulf %258, %255 : vector<10x128xf32>
    %260 = arith.mulf %259, %255 : vector<10x128xf32>
    %261 = arith.mulf %260, %255 : vector<10x128xf32>
    %262 = arith.addf %255, %261 : vector<10x128xf32>
    %cst_65 = arith.constant 0.797884583 : f32
    %263 = vector.broadcast %cst_65 : f32 to vector<10x128xf32>
    %264 = arith.mulf %263, %262 : vector<10x128xf32>
    %265 = math.tanh %264 : vector<10x128xf32>
    %cst_66 = arith.constant 1.000000e+00 : f32
    %266 = vector.broadcast %cst_66 : f32 to vector<10x128xf32>
    %267 = arith.addf %266, %265 : vector<10x128xf32>
    %268 = arith.mulf %257, %267 : vector<10x128xf32>
    %269 = arith.truncf %268 : vector<10x128xf32> to vector<10x128xbf16>
    %cst_67 = arith.constant dense<0.000000e+00> : vector<10x32xf32>
    %270 = tpu.matmul %269, %156, %cst_67 {dimension_numbers = #tpu.dot_dimension_numbers<[1], [0], [0], [1], [0, 0, 1, 1], [], []>} : vector<10x128xbf16>, vector<128x32xbf16>, vector<10x32xf32> -> vector<10x32xf32>
    %271 = arith.addf %229, %270 : vector<10x32xf32>
    %272 = vector.broadcast %149 : vector<1x32xf32> to vector<10x32xf32>
    %273 = arith.addf %271, %272 : vector<10x32xf32>
    %274 = vector.extract_strided_slice %273 {offsets = [0, 0], sizes = [1, 32], strides = [1, 1]} : vector<10x32xf32> to vector<1x32xf32>
    %275 = vector.extract_strided_slice %273 {offsets = [5, 0], sizes = [1, 32], strides = [1, 1]} : vector<10x32xf32> to vector<1x32xf32>
    %cst_68 = arith.constant 0.000000e+00 : f32
    %276 = vector.broadcast %cst_68 : f32 to vector<6x32xf32>
    %277 = tpu.concatenate %274, %275, %276 in 0 : vector<1x32xf32>, vector<1x32xf32>, vector<6x32xf32> -> vector<8x32xf32>
    %c0_69 = arith.constant 0 : index
    %c0_70 = arith.constant 0 : index
    %278 = vector.load %arg4[%c0_69, %c0_70] : memref<8x128xf32, #tpu.memory_space<vmem>>, vector<1x32xf32>
    %c1_71 = arith.constant 1 : index
    %c0_72 = arith.constant 0 : index
    %279 = vector.load %arg4[%c1_71, %c0_72] : memref<8x128xf32, #tpu.memory_space<vmem>>, vector<1x32xf32>
    %c2 = arith.constant 2 : index
    %c0_73 = arith.constant 0 : index
    %280 = vector.load %arg4[%c2, %c0_73] : memref<8x128xf32, #tpu.memory_space<vmem>>, vector<1x128xf32>
    %cst_74 = arith.constant dense<0.000000e+00> : vector<8xf32>
    %281 = vector.multi_reduction <add>, %277, %cst_74 [1] : vector<8x32xf32> to vector<8xf32>
    %282 = vector.shape_cast %281 : vector<8xf32> to vector<8x1xf32>
    %cst_75 = arith.constant 3.200000e+01 : f32
    %283 = vector.broadcast %cst_75 : f32 to vector<8x1xf32>
    %284 = arith.divf %282, %283 : vector<8x1xf32>
    %285 = vector.broadcast %284 : vector<8x1xf32> to vector<8x32xf32>
    %286 = arith.subf %277, %285 : vector<8x32xf32>
    %287 = arith.mulf %286, %286 : vector<8x32xf32>
    %cst_76 = arith.constant dense<0.000000e+00> : vector<8xf32>
    %288 = vector.multi_reduction <add>, %287, %cst_76 [1] : vector<8x32xf32> to vector<8xf32>
    %289 = vector.shape_cast %288 : vector<8xf32> to vector<8x1xf32>
    %cst_77 = arith.constant 3.200000e+01 : f32
    %290 = vector.broadcast %cst_77 : f32 to vector<8x1xf32>
    %291 = arith.divf %289, %290 : vector<8x1xf32>
    %292 = vector.broadcast %284 : vector<8x1xf32> to vector<8x32xf32>
    %293 = arith.subf %277, %292 : vector<8x32xf32>
    %cst_78 = arith.constant 9.99999996E-13 : f32
    %294 = vector.broadcast %cst_78 : f32 to vector<8x1xf32>
    %295 = arith.addf %291, %294 : vector<8x1xf32>
    %296 = math.rsqrt %295 : vector<8x1xf32>
    %297 = vector.broadcast %296 : vector<8x1xf32> to vector<8x32xf32>
    %298 = arith.mulf %293, %297 : vector<8x32xf32>
    %299 = vector.broadcast %278 : vector<1x32xf32> to vector<8x32xf32>
    %300 = arith.mulf %298, %299 : vector<8x32xf32>
    %301 = vector.broadcast %279 : vector<1x32xf32> to vector<8x32xf32>
    %302 = arith.addf %300, %301 : vector<8x32xf32>
    %303 = arith.truncf %302 : vector<8x32xf32> to vector<8x32xbf16>
    %c0_79 = arith.constant 0 : index
    %c0_80 = arith.constant 0 : index
    %304 = vector.load %arg8[%c0_79, %c0_80] : memref<32x128xbf16, #tpu.memory_space<vmem>>, vector<32x128xbf16>
    %cst_81 = arith.constant dense<0.000000e+00> : vector<8x128xf32>
    %305 = tpu.matmul %303, %304, %cst_81 {dimension_numbers = #tpu.dot_dimension_numbers<[1], [0], [0], [1], [0, 0, 1, 1], [], []>} : vector<8x32xbf16>, vector<32x128xbf16>, vector<8x128xf32> -> vector<8x128xf32>
    %306 = vector.broadcast %280 : vector<1x128xf32> to vector<8x128xf32>
    %307 = arith.addf %305, %306 : vector<8x128xf32>
    %c0_82 = arith.constant 0 : index
    %c0_83 = arith.constant 0 : index
    %308 = vector.load %arg9[%c0_82, %c0_83] : memref<8x128xf32, #tpu.memory_space<vmem>>, vector<8x128xf32>
    tpu.vector_store %arg9[%c0_82, %c0_83], %307 {strides = array<i32>} : memref<8x128xf32, #tpu.memory_space<vmem>>, vector<8x128xf32>,
    return
  }
}

</mosaic_0001>

<llo_original>
// kernel: vit_forward.1
$region0: #{vit_forward.1}
  #allocation0 [shape = 'u32[]', space=smem, size = 0x4, offset = 0x4, fixed_abs, tag = 'smem constant byte address 0x4 - core index']
  #allocation1 [shape = 'u32[72,128]{1,0:T(1,128)}', space=vmem, size = 0x9000, scoped, tag = 'internal scratch']
  %s0 = inlined_call_operand.vmem [shape: bf16[10,192], index: 0, kind: input, shape index: {}]
  %s1 = inlined_call_operand.vmem [shape: bf16[192,32], index: 1, kind: input, shape index: {}]
  %s2 = inlined_call_operand.vmem [shape: f32[10,32], index: 2, kind: input, shape index: {}]
  %s3 = inlined_call_operand.vmem [shape: f32[10,10], index: 3, kind: input, shape index: {}]
  %s4 = inlined_call_operand.vmem [shape: f32[8,128], index: 4, kind: input, shape index: {}]
  %s5 = inlined_call_operand.vmem [shape: f32[2,8,128], index: 5, kind: input, shape index: {}]
  %s6 = inlined_call_operand.vmem [shape: bf16[2,32,256], index: 6, kind: input, shape index: {}]
  %s7 = inlined_call_operand.vmem [shape: bf16[2,128,32], index: 7, kind: input, shape index: {}]
  %s8 = inlined_call_operand.vmem [shape: bf16[32,128], index: 8, kind: input, shape index: {}]
  %s9 = inlined_call_operand.vmem [shape: f32[8,128], index: 9, kind: output, shape index: {}]
  %s10 = sld [smem:[#allocation0]]
  $region46: #{vit_forward.1} parent=0
    _
  %s12 = ssub.s32 1, %s10
  %s13 = scalar_select 0, %s12, %s10
  // Predicated region
  $region2: #{vit_forward.1} parent=0 // pred_check
    _
  $region3: #{vit_forward.1} parent=0 // pred_check_branch
    %15 = sbr.rel (0) target = $region5
  $region4: #{vit_forward.1} parent=0 // pred_region
    _
  $region5: #{vit_forward.1} parent=0 // pred_fallthru
    _
  // Predicated region
  $region6: #{vit_forward.1} parent=0 // pred_check
    _
  $region7: #{vit_forward.1} parent=0 // pred_check_branch
    %17 = sbr.rel (0) target = $region9
  $region8: #{vit_forward.1} parent=0 // pred_region
    _
  $region9: #{vit_forward.1} parent=0 // pred_fallthru
    _
  // Predicated region
  $region10: #{vit_forward.1} parent=0 // pred_check
    _
  $region11: #{vit_forward.1} parent=0 // pred_check_branch
    %19 = sbr.rel (0) target = $region13
  $region12: #{vit_forward.1} parent=0 // pred_region
    _
  $region13: #{vit_forward.1} parent=0 // pred_fallthru
    _
  // Predicated region
  $region14: #{vit_forward.1} parent=0 // pred_check
    _
  $region15: #{vit_forward.1} parent=0 // pred_check_branch
    %21 = sbr.rel (0) target = $region17
  $region16: #{vit_forward.1} parent=0 // pred_region
    _
  $region17: #{vit_forward.1} parent=0 // pred_fallthru
    _
  // Predicated region
  $region18: #{vit_forward.1} parent=0 // pred_check
    _
  $region19: #{vit_forward.1} parent=0 // pred_check_branch
    %23 = sbr.rel (0) target = $region21
  $region20: #{vit_forward.1} parent=0 // pred_region
    _
  $region21: #{vit_forward.1} parent=0 // pred_fallthru
    _
  // Predicated region
  $region22: #{vit_forward.1} parent=0 // pred_check
    _
  $region23: #{vit_forward.1} parent=0 // pred_check_branch
    %25 = sbr.rel (0) target = $region25
  $region24: #{vit_forward.1} parent=0 // pred_region
    _
  $region25: #{vit_forward.1} parent=0 // pred_fallthru
    _
  // Predicated region
  $region26: #{vit_forward.1} parent=0 // pred_check
    _
  $region27: #{vit_forward.1} parent=0 // pred_check_branch
    %27 = sbr.rel (0) target = $region29
  $region28: #{vit_forward.1} parent=0 // pred_region
    _
  $region29: #{vit_forward.1} parent=0 // pred_fallthru
    _
  // Predicated region
  $region30: #{vit_forward.1} parent=0 // pred_check
    _
  $region31: #{vit_forward.1} parent=0 // pred_check_branch
    %29 = sbr.rel (0) target = $region33
  $region32: #{vit_forward.1} parent=0 // pred_region
    _
  $region33: #{vit_forward.1} parent=0 // pred_fallthru
    _
  // Predicated region
  $region34: #{vit_forward.1} parent=0 // pred_check
    _
  $region35: #{vit_forward.1} parent=0 // pred_check_branch
    %31 = sbr.rel (0) target = $region37
  $region36: #{vit_forward.1} parent=0 // pred_region
    _
  $region37: #{vit_forward.1} parent=0 // pred_fallthru
    _
  %v33 = vld [vmem:[%s2] sm:$0xff]
  %v34 = vld [vmem:[%s2 + $0x8] sm:$0x3]
  %v35 = vld [vmem:[%s0] sm:$0xff]
  %v36 = vld [vmem:[%s0 + $0x8] sm:$0x11]
  %v37 = vld [vmem:[%s1] sm:$0xf]
  %v38 = vld [vmem:[%s1 + $0x4] sm:$0xf]
  %v39 = vld [vmem:[%s1 + $0x8] sm:$0xf]
  %v40 = vld [vmem:[%s1 + $0xc] sm:$0xf]
  %v41 = vld [vmem:[%s1 + $0x10] sm:$0xf]
  %v42 = vld [vmem:[%s1 + $0x14] sm:$0xf]
  %v43 = vld [vmem:[%s1 + $0x18] sm:$0xf]
  %v44 = vld [vmem:[%s1 + $0x1c] sm:$0xf]
  %v45 = vld [vmem:[%s1 + $0x20] sm:$0xf]
  %v46 = vld [vmem:[%s1 + $0x24] sm:$0xf]
  %v47 = vld [vmem:[%s1 + $0x28] sm:$0xf]
  %v48 = vld [vmem:[%s1 + $0x2c] sm:$0xf]
  %v49 = vld [vmem:[%s1 + $0x30] sm:$0xf]
  %v50 = vld [vmem:[%s1 + $0x34] sm:$0xf]
  %v51 = vld [vmem:[%s1 + $0x38] sm:$0xf]
  %v52 = vld [vmem:[%s1 + $0x3c] sm:$0xf]
  %v53 = vld [vmem:[%s1 + $0x40] sm:$0xf]
  %v54 = vld [vmem:[%s1 + $0x44] sm:$0xf]
  %v55 = vld [vmem:[%s1 + $0x48] sm:$0xf]
  %v56 = vld [vmem:[%s1 + $0x4c] sm:$0xf]
  %v57 = vld [vmem:[%s1 + $0x50] sm:$0xf]
  %v58 = vld [vmem:[%s1 + $0x54] sm:$0xf]
  %v59 = vld [vmem:[%s1 + $0x58] sm:$0xf]
  %v60 = vld [vmem:[%s1 + $0x5c] sm:$0xf]
  %v63 = vunpack.c.l.b16 %v35
  %v64 = vunpack.c.h.b16 %v35
  %v65 = vunpack.c.l.b16 %v36
  %v66 = vunpack.c.h.b16 %v36
  %v67 = vpack.c.b16 %v65, %v63
  %v68 = vpack.c.b16 %v66, %v64
  %v94 = vunpack.c.l.b16 %v37
  %v95 = vunpack.c.l.b16 %v38
  %v96 = vunpack.c.l.b16 %v39
  %v97 = vunpack.c.l.b16 %v40
  %v98 = vunpack.c.l.b16 %v41
  %v99 = vunpack.c.l.b16 %v42
  %v100 = vunpack.c.l.b16 %v43
  %v101 = vunpack.c.l.b16 %v44
  %v102 = vunpack.c.l.b16 %v45
  %v103 = vunpack.c.l.b16 %v46
  %v104 = vunpack.c.l.b16 %v47
  %v105 = vunpack.c.l.b16 %v48
  %v106 = vunpack.c.l.b16 %v49
  %v107 = vunpack.c.l.b16 %v50
  %v108 = vunpack.c.l.b16 %v51
  %v109 = vunpack.c.l.b16 %v52
  %v110 = vunpack.c.l.b16 %v53
  %v111 = vunpack.c.l.b16 %v54
  %v112 = vunpack.c.l.b16 %v55
  %v113 = vunpack.c.l.b16 %v56
  %v114 = vunpack.c.l.b16 %v57
  %v115 = vunpack.c.l.b16 %v58
  %v116 = vunpack.c.l.b16 %v59
  %v117 = vunpack.c.l.b16 %v60
  %v118 = vpack.c.b16 %v95, %v94
  %v119 = vpack.c.b16 %v97, %v96
  %v120 = vpack.c.b16 %v99, %v98
  %v121 = vpack.c.b16 %v101, %v100
  %v122 = vpack.c.b16 %v103, %v102
  %v123 = vpack.c.b16 %v105, %v104
  %v124 = vpack.c.b16 %v107, %v106
  %v125 = vpack.c.b16 %v109, %v108
  %v126 = vpack.c.b16 %v111, %v110
  %v127 = vpack.c.b16 %v113, %v112
  %v128 = vpack.c.b16 %v115, %v114
  %v129 = vpack.c.b16 %v117, %v116
  %vm142 = vcmask 523264
  %v144 = vsel %vm142, %v68, 0
  %146 = vmatpush.bf16.msra.mxu0 %v125
  %147 = vmatpush.bf16.msra.mxu0 %v124
  %148 = vmatpush.bf16.msra.mxu0 %v123
  %149 = vmatpush.bf16.msra.mxu0 %v122
  %150 = vmatpush.bf16.msra.mxu0 %v121
  %151 = vmatpush.bf16.msra.mxu0 %v120
  %152 = vmatpush.bf16.msra.mxu0 %v119
  %153 = vmatpush.bf16.msra.mxu0 %v118
  %154 = vmatmul.bf16.gmra.mxu0 %v67
  %v155 = vpop.f32.mrf.mxu0
  %v156 = vadd.f32 0.0, %v155
  %v157 = vpop.f32.mrf.mxu0
  %v158 = vadd.f32 0.0, %v157
  %159 = vdwg.mxu0
  %160 = vmatpush.bf16.msra.mxu0 0
  %161 = vmatpush.bf16.msra.mxu0 0
  %162 = vmatpush.bf16.msra.mxu0 0
  %163 = vmatpush.bf16.msra.mxu0 0
  %164 = vmatpush.bf16.msra.mxu0 %v129
  %165 = vmatpush.bf16.msra.mxu0 %v128
  %166 = vmatpush.bf16.msra.mxu0 %v127
  %167 = vmatpush.bf16.msra.mxu0 %v126
  %168 = vmatmul.bf16.gmra.mxu0 %v144
  %v169 = vpop.f32.mrf.mxu0
  %v170 = vadd.f32 %v156, %v169
  %v171 = vpop.f32.mrf.mxu0
  %v172 = vadd.f32 %v158, %v171
  %173 = vdwg.mxu0
  %v174 = vadd.f32 %v33, %v170
  %v175 = vadd.f32 %v34, %v172
  %v176 = vld [vmem:[%s3] sm:$0xff]
  %v177 = vld [vmem:[%s3 + $0x8] sm:$0x3]
  %v178 = vld [vmem:[%s5] sm:$0xff]
  %v179 = vld [vmem:[%s6] sm:$0xff]
  %v180 = vld [vmem:[%s6 + $0x8] sm:$0xff]
  %v181 = vld [vmem:[%s6 + $0x10] sm:$0xff]
  %v182 = vld [vmem:[%s6 + $0x18] sm:$0xff]
  %v183 = vld [vmem:[%s7] sm:$0xf]
  %v184 = vld [vmem:[%s7 + $0x4] sm:$0xf]
  %v185 = vld [vmem:[%s7 + $0x8] sm:$0xf]
  %v186 = vld [vmem:[%s7 + $0xc] sm:$0xf]
  %v187 = vld [vmem:[%s7 + $0x10] sm:$0xf]
  %v188 = vld [vmem:[%s7 + $0x14] sm:$0xf]
  %v189 = vld [vmem:[%s7 + $0x18] sm:$0xf]
  %v190 = vld [vmem:[%s7 + $0x1c] sm:$0xf]
  %v191 = vld [vmem:[%s7 + $0x20] sm:$0xf]
  %v192 = vld [vmem:[%s7 + $0x24] sm:$0xf]
  %v193 = vld [vmem:[%s7 + $0x28] sm:$0xf]
  %v194 = vld [vmem:[%s7 + $0x2c] sm:$0xf]
  %v195 = vld [vmem:[%s7 + $0x30] sm:$0xf]
  %v196 = vld [vmem:[%s7 + $0x34] sm:$0xf]
  %v197 = vld [vmem:[%s7 + $0x38] sm:$0xf]
  %v198 = vld [vmem:[%s7 + $0x3c] sm:$0xf]
  %vm199 = vcmask 261120
  %v200 = vsel %vm199, %v174, 0.0
  %201 = vadd.xlane.f32.xlu0 %v200
  %v202 = vpop.xlane.xlu0 %201
  %vm203 = vcmask 254976
  %v204 = vsel %vm203, %v175, 0.0
  %205 = vadd.xlane.f32.xlu0 %v204
  %v206 = vpop.xlane.xlu0 %205
  %v207 = vrcp.pop 32.0
  %v208 = vmul.f32 32.0, %v207
  %v209 = vsub.f32 1.0, %v208
  %v210 = vmul.f32 %v207, %v209
  %v211 = vadd.f32 %v207, %v210
  %vm212 = vweird.f32 %v207
  %v213 = vsel %vm212, %v207, %v211
  %v214 = vmul.f32 %v202, %v213
  %v215 = vmul.f32 %v206, %v213
  %v216 = vsub.f32 %v174, %v214
  %v217 = vsub.f32 %v175, %v215
  %v218 = vmul.f32 %v216, %v216
  %v219 = vmul.f32 %v217, %v217
  %v220 = vsel %vm199, %v218, 0.0
  %221 = vadd.xlane.f32.xlu0 %v220
  %v222 = vpop.xlane.xlu0 %221
  %v223 = vsel %vm203, %v219, 0.0
  %224 = vadd.xlane.f32.xlu0 %v223
  %v225 = vpop.xlane.xlu0 %224
  %v226 = vmul.f32 %v222, %v213
  %v227 = vmul.f32 %v225, %v213
  %v228 = vadd.f32 %v226, 1e-12
  %v229 = vadd.f32 %v227, 1e-12
  %v230 = vrsqrt.pop %v228
  %v231 = vmul.f32 %v230, %v228
  %v232 = vmul.f32 %v231, %v230
  %v233 = vmul.f32 0.5, %v232
  %v234 = vsub.f32 1.5, %v233
  %v235 = vmul.f32 %v230, %v234
  %vm236 = vweird.f32 %v228
  %vm237 = vweird.f32 %v230
  %vm238 = vmor %vm236, %vm237
  %v239 = vsel %vm238, %v230, %v235
  %v240 = vrsqrt.pop %v229
  %v241 = vmul.f32 %v240, %v229
  %v242 = vmul.f32 %v241, %v240
  %v243 = vmul.f32 0.5, %v242
  %v244 = vsub.f32 1.5, %v243
  %v245 = vmul.f32 %v240, %v244
  %vm246 = vweird.f32 %v229
  %vm247 = vweird.f32 %v240
  %vm248 = vmor %vm246, %vm247
  %v249 = vsel %vm248, %v240, %v245
  %v250 = vmul.f32 %v216, %v239
  %v251 = vmul.f32 %v217, %v249
  %v252 = vperm.slane %v178, 0
  %v253 = vmul.f32 %v250, %v252
  %v254 = vmul.f32 %v251, %v252
  %v255 = vperm.slane %v178, 1
  %v256 = vadd.f32 %v253, %v255
  %v257 = vadd.f32 %v254, %v255
  %v258 = vpack.c.bf16 %v257, %v256
  %v259 = vperm.slane %v178, 2
  %v264 = vunpack.c.l.b16 %v179
  %v265 = vunpack.c.l.b16 %v180
  %v266 = vunpack.c.l.b16 %v181
  %v267 = vunpack.c.l.b16 %v182
  %v268 = vpack.c.b16 %v265, %v264
  %v269 = vpack.c.b16 %v267, %v266
  %v273 = vsel %vm199, %v258, 0
  %275 = vmatpush.bf16.msra.mxu0 0
  %276 = vmatpush.bf16.msra.mxu0 0
  %277 = vmatpush.bf16.msra.mxu0 0
  %278 = vmatpush.bf16.msra.mxu0 0
  %279 = vmatpush.bf16.msra.mxu0 0
  %280 = vmatpush.bf16.msra.mxu0 0
  %281 = vmatpush.bf16.msra.mxu0 %v269
  %282 = vmatpush.bf16.msra.mxu0 %v268
  %283 = vmatmul.bf16.gmra.mxu0 %v273
  %v284 = vpop.f32.mrf.mxu0
  %v285 = vadd.f32 %v259, %v284
  %v286 = vpop.f32.mrf.mxu0
  %v287 = vadd.f32 %v259, %v286
  %288 = vdwg.mxu0
  %291 = vrot.lane.b32.xlu0 %v285, 112
  %v292 = vpop.permute.xlu0 %291
  %293 = vrot.lane.b32.xlu0 %v287, 112
  %v294 = vpop.permute.xlu0 %293
  %v297 = vpack.c.bf16 %v285, %v285
  %v298 = vpack.c.bf16 %v287, %v287
  %v299 = vpack.c.bf16 %v292, %v292
  %v300 = vpack.c.bf16 %v294, %v294
  %v303 = vunpack.c.l.b16 %v297
  %v304 = vunpack.c.l.b16 %v298
  %v305 = vpack.c.b16 %v304, %v303
  %306 = vrot.lane.b32.xlu0 %v305, 96
  %v307 = vpop.permute.xlu0 %306
  %vm308 = vcmask 130048
  %v310 = vsel %vm308, %v305, 0
  %v313 = vsel %vm308, %v307, 0
  %315 = vmatpush.bf16.xpose.msra.mxu0 0
  %316 = vmatpush.bf16.xpose.msra.mxu0 0
  %317 = vmatpush.bf16.xpose.msra.mxu0 0
  %318 = vmatpush.bf16.xpose.msra.mxu0 0
  %319 = vmatpush.bf16.xpose.msra.mxu0 0
  %320 = vmatpush.bf16.xpose.msra.mxu0 0
  %321 = vmatpush.bf16.xpose.msra.mxu0 0
  %322 = vmatpush.bf16.xpose.msra.mxu0 %v313
  %323 = vmatmul.bf16.gmra.mxu0 %v310
  %v324 = vpop.f32.mrf.mxu0
  %v325 = vadd.f32 %v176, %v324
  %v326 = vpop.f32.mrf.mxu0
  %v327 = vadd.f32 %v177, %v326
  %328 = vdwg.mxu0
  %v331 = vunpack.c.l.b16 %v299
  %v332 = vunpack.c.l.b16 %v300
  %v333 = vpack.c.b16 %v332, %v331
  %334 = vrot.lane.b32.xlu0 %v333, 96
  %v335 = vpop.permute.xlu0 %334
  %v337 = vsel %vm308, %v333, 0
  %v340 = vsel %vm308, %v335, 0
  %342 = vmatpush.bf16.xpose.msra.mxu0 0
  %343 = vmatpush.bf16.xpose.msra.mxu0 0
  %344 = vmatpush.bf16.xpose.msra.mxu0 0
  %345 = vmatpush.bf16.xpose.msra.mxu0 0
  %346 = vmatpush.bf16.xpose.msra.mxu0 0
  %347 = vmatpush.bf16.xpose.msra.mxu0 0
  %348 = vmatpush.bf16.xpose.msra.mxu0 0
  %349 = vmatpush.bf16.xpose.msra.mxu0 %v340
  %350 = vmatmul.bf16.gmra.mxu0 %v337
  %v351 = vpop.f32.mrf.mxu0
  %v352 = vadd.f32 %v176, %v351
  %v353 = vpop.f32.mrf.mxu0
  %v354 = vadd.f32 %v177, %v353
  %355 = vdwg.mxu0
  %v356 = vmul.f32 %v325, 1.442695
  %v357 = vpow.pop %v356
  %v358 = vmul.f32 %v327, 1.442695
  %v359 = vpow.pop %v358
  %v360 = vmul.f32 %v352, 1.442695
  %v361 = vpow.pop %v360
  %v362 = vmul.f32 %v354, 1.442695
  %v363 = vpow.pop %v362
  %vm364 = vcmask 80896
  %v365 = vsel %vm364, %v357, 0.0
  %366 = vadd.xlane.f32.xlu0 %v365
  %v367 = vpop.xlane.xlu0 %366
  %vm368 = vcmask 74752
  %v369 = vsel %vm368, %v359, 0.0
  %370 = vadd.xlane.f32.xlu0 %v369
  %v371 = vpop.xlane.xlu0 %370
  %v372 = vsel %vm364, %v361, 0.0
  %373 = vadd.xlane.f32.xlu0 %v372
  %v374 = vpop.xlane.xlu0 %373
  %v375 = vsel %vm368, %v363, 0.0
  %376 = vadd.xlane.f32.xlu0 %v375
  %v377 = vpop.xlane.xlu0 %376
  %v378 = vrcp.pop %v367
  %v379 = vrcp.pop %v371
  %v380 = vrcp.pop %v374
  %v381 = vrcp.pop %v377
  %v382 = vmul.f32 %v357, %v378
  %v383 = vmul.f32 %v359, %v379
  %v384 = vmul.f32 %v361, %v380
  %v385 = vmul.f32 %v363, %v381
  %v386 = vpack.c.bf16 %v382, %v382
  %v387 = vpack.c.bf16 %v383, %v383
  %v388 = vpack.c.bf16 %v384, %v384
  %v389 = vpack.c.bf16 %v385, %v385
  %v392 = vunpack.c.l.b16 %v386
  %v393 = vunpack.c.l.b16 %v387
  %v394 = vpack.c.b16 %v393, %v392
  %395 = vrot.lane.b32.xlu0 %v305, 64
  %v396 = vpop.permute.xlu0 %395
  %v398 = vsel %vm364, %v394, 0
  %vm400 = vcmask 1044480
  %v402 = vsel %vm400, %v396, 0
  %404 = vmatpush.bf16.msra.mxu0 0
  %405 = vmatpush.bf16.msra.mxu0 0
  %406 = vmatpush.bf16.msra.mxu0 0
  %407 = vmatpush.bf16.msra.mxu0 0
  %408 = vmatpush.bf16.msra.mxu0 0
  %409 = vmatpush.bf16.msra.mxu0 0
  %410 = vmatpush.bf16.msra.mxu0 0
  %411 = vmatpush.bf16.msra.mxu0 %v402
  %412 = vmatmul.bf16.gmra.mxu0 %v398
  %v413 = vpop.f32.mrf.mxu0
  %v414 = vadd.f32 0.0, %v413
  %v415 = vpop.f32.mrf.mxu0
  %v416 = vadd.f32 0.0, %v415
  %417 = vdwg.mxu0
  %v420 = vunpack.c.l.b16 %v388
  %v421 = vunpack.c.l.b16 %v389
  %v422 = vpack.c.b16 %v421, %v420
  %423 = vrot.lane.b32.xlu0 %v333, 64
  %v424 = vpop.permute.xlu0 %423
  %v426 = vsel %vm364, %v422, 0
  %v429 = vsel %vm400, %v424, 0
  %431 = vmatpush.bf16.msra.mxu0 0
  %432 = vmatpush.bf16.msra.mxu0 0
  %433 = vmatpush.bf16.msra.mxu0 0
  %434 = vmatpush.bf16.msra.mxu0 0
  %435 = vmatpush.bf16.msra.mxu0 0
  %436 = vmatpush.bf16.msra.mxu0 0
  %437 = vmatpush.bf16.msra.mxu0 0
  %438 = vmatpush.bf16.msra.mxu0 %v429
  %439 = vmatmul.bf16.gmra.mxu0 %v426
  %v440 = vpop.f32.mrf.mxu0
  %v441 = vadd.f32 0.0, %v440
  %v442 = vpop.f32.mrf.mxu0
  %v443 = vadd.f32 0.0, %v442
  %444 = vdwg.mxu0
  %v445 = vpack.c.bf16 %v416, %v414
  %v446 = vpack.c.bf16 %v443, %v441
  %447 = vrot.lane.b32.xlu0 %v269, 32
  %v448 = vpop.permute.xlu0 %447
  %v451 = vsel %vm308, %v446, 0
  %453 = vmatpush.bf16.msra.mxu0 0
  %454 = vmatpush.bf16.msra.mxu0 0
  %455 = vmatpush.bf16.msra.mxu0 0
  %456 = vmatpush.bf16.msra.mxu0 0
  %457 = vmatpush.bf16.msra.mxu0 0
  %458 = vmatpush.bf16.msra.mxu0 0
  %459 = vmatpush.bf16.msra.mxu0 0
  %460 = vmatpush.bf16.msra.mxu0 %v448
  %461 = vmatmul.bf16.gmra.mxu0 %v451
  %v462 = vpop.f32.mrf.mxu0
  %v463 = vadd.f32 0.0, %v462
  %v464 = vpop.f32.mrf.mxu0
  %v465 = vadd.f32 0.0, %v464
  %466 = vdwg.mxu0
  %467 = vrot.lane.b32.xlu0 %v268, 32
  %v468 = vpop.permute.xlu0 %467
  %v471 = vsel %vm308, %v445, 0
  %473 = vmatpush.bf16.msra.mxu0 0
  %474 = vmatpush.bf16.msra.mxu0 0
  %475 = vmatpush.bf16.msra.mxu0 0
  %476 = vmatpush.bf16.msra.mxu0 0
  %477 = vmatpush.bf16.msra.mxu0 0
  %478 = vmatpush.bf16.msra.mxu0 0
  %479 = vmatpush.bf16.msra.mxu0 0
  %480 = vmatpush.bf16.msra.mxu0 %v468
  %481 = vmatmul.bf16.gmra.mxu0 %v471
  %v482 = vpop.f32.mrf.mxu0
  %v483 = vadd.f32 %v463, %v482
  %v484 = vpop.f32.mrf.mxu0
  %v485 = vadd.f32 %v465, %v484
  %486 = vdwg.mxu0
  %v487 = vadd.f32 %v174, %v483
  %v488 = vadd.f32 %v175, %v485
  %v489 = vperm.slane %v178, 3
  %v490 = vadd.f32 %v487, %v489
  %v491 = vadd.f32 %v488, %v489
  %v492 = vsel %vm199, %v490, 0.0
  %493 = vadd.xlane.f32.xlu0 %v492
  %v494 = vpop.xlane.xlu0 %493
  %v495 = vsel %vm203, %v491, 0.0
  %496 = vadd.xlane.f32.xlu0 %v495
  %v497 = vpop.xlane.xlu0 %496
  %v498 = vmul.f32 %v494, %v213
  %v499 = vmul.f32 %v497, %v213
  %v500 = vsub.f32 %v490, %v498
  %v501 = vsub.f32 %v491, %v499
  %v502 = vmul.f32 %v500, %v500
  %v503 = vmul.f32 %v501, %v501
  %v504 = vsel %vm199, %v502, 0.0
  %505 = vadd.xlane.f32.xlu0 %v504
  %v506 = vpop.xlane.xlu0 %505
  %v507 = vsel %vm203, %v503, 0.0
  %508 = vadd.xlane.f32.xlu0 %v507
  %v509 = vpop.xlane.xlu0 %508
  %v510 = vmul.f32 %v506, %v213
  %v511 = vmul.f32 %v509, %v213
  %v512 = vadd.f32 %v510, 1e-12
  %v513 = vadd.f32 %v511, 1e-12
  %v514 = vrsqrt.pop %v512
  %v515 = vmul.f32 %v514, %v512
  %v516 = vmul.f32 %v515, %v514
  %v517 = vmul.f32 0.5, %v516
  %v518 = vsub.f32 1.5, %v517
  %v519 = vmul.f32 %v514, %v518
  %vm520 = vweird.f32 %v512
  %vm521 = vweird.f32 %v514
  %vm522 = vmor %vm520, %vm521
  %v523 = vsel %vm522, %v514, %v519
  %v524 = vrsqrt.pop %v513
  %v525 = vmul.f32 %v524, %v513
  %v526 = vmul.f32 %v525, %v524
  %v527 = vmul.f32 0.5, %v526
  %v528 = vsub.f32 1.5, %v527
  %v529 = vmul.f32 %v524, %v528
  %vm530 = vweird.f32 %v513
  %vm531 = vweird.f32 %v524
  %vm532 = vmor %vm530, %vm531
  %v533 = vsel %vm532, %v524, %v529
  %v534 = vmul.f32 %v500, %v523
  %v535 = vmul.f32 %v501, %v533
  %v536 = vperm.slane %v178, 4
  %v537 = vmul.f32 %v534, %v536
  %v538 = vmul.f32 %v535, %v536
  %v539 = vperm.slane %v178, 5
  %v540 = vadd.f32 %v537, %v539
  %v541 = vadd.f32 %v538, %v539
  %v542 = vpack.c.bf16 %v541, %v540
  %v543 = vperm.slane %v178, 6
  %v544 = vunpack.c.h.b16 %v179
  %v545 = vunpack.c.h.b16 %v180
  %v546 = vunpack.c.h.b16 %v181
  %v547 = vunpack.c.h.b16 %v182
  %v548 = vpack.c.b16 %v545, %v544
  %v549 = vpack.c.b16 %v547, %v546
  %v553 = vsel %vm199, %v542, 0
  %555 = vmatpush.bf16.msra.mxu0 0
  %556 = vmatpush.bf16.msra.mxu0 0
  %557 = vmatpush.bf16.msra.mxu0 0
  %558 = vmatpush.bf16.msra.mxu0 0
  %559 = vmatpush.bf16.msra.mxu0 0
  %560 = vmatpush.bf16.msra.mxu0 0
  %561 = vmatpush.bf16.msra.mxu0 %v549
  %562 = vmatpush.bf16.msra.mxu0 %v548
  %563 = vmatmul.bf16.gmra.mxu0 %v553
  %v564 = vpop.f32.mrf.mxu0
  %v565 = vadd.f32 %v543, %v564
  %v566 = vpop.f32.mrf.mxu0
  %v567 = vadd.f32 %v543, %v566
  %568 = vdwg.mxu0
  %v569 = vmul.f32 %v565, 0.5
  %v570 = vmul.f32 %v567, 0.5
  %v571 = vmul.f32 %v565, 0.044715
  %v572 = vmul.f32 %v567, 0.044715
  %v573 = vmul.f32 %v571, %v565
  %v574 = vmul.f32 %v572, %v567
  %v575 = vmul.f32 %v573, %v565
  %v576 = vmul.f32 %v574, %v567
  %v577 = vadd.f32 %v565, %v575
  %v578 = vadd.f32 %v567, %v576
  %v579 = vmul.f32 %v577, 0.7978846
  %v580 = vmul.f32 %v578, 0.7978846
  %v581 = vtanh.pop %v579
  %v582 = vtanh.pop %v580
  %v583 = vadd.f32 %v581, 1.0
  %v584 = vadd.f32 %v582, 1.0
  %v585 = vmul.f32 %v569, %v583
  %v586 = vmul.f32 %v570, %v584
  %v587 = vpack.c.bf16 %v586, %v585
  %v604 = vunpack.c.l.b16 %v183
  %v605 = vunpack.c.l.b16 %v184
  %v606 = vunpack.c.l.b16 %v185
  %v607 = vunpack.c.l.b16 %v186
  %v608 = vunpack.c.l.b16 %v187
  %v609 = vunpack.c.l.b16 %v188
  %v610 = vunpack.c.l.b16 %v189
  %v611 = vunpack.c.l.b16 %v190
  %v612 = vunpack.c.l.b16 %v191
  %v613 = vunpack.c.l.b16 %v192
  %v614 = vunpack.c.l.b16 %v193
  %v615 = vunpack.c.l.b16 %v194
  %v616 = vunpack.c.l.b16 %v195
  %v617 = vunpack.c.l.b16 %v196
  %v618 = vunpack.c.l.b16 %v197
  %v619 = vunpack.c.l.b16 %v198
  %v620 = vpack.c.b16 %v605, %v604
  %v621 = vpack.c.b16 %v607, %v606
  %v622 = vpack.c.b16 %v609, %v608
  %v623 = vpack.c.b16 %v611, %v610
  %v624 = vpack.c.b16 %v613, %v612
  %v625 = vpack.c.b16 %v615, %v614
  %v626 = vpack.c.b16 %v617, %v616
  %v627 = vpack.c.b16 %v619, %v618
  %636 = vmatpush.bf16.msra.mxu0 %v627
  %637 = vmatpush.bf16.msra.mxu0 %v626
  %638 = vmatpush.bf16.msra.mxu0 %v625
  %639 = vmatpush.bf16.msra.mxu0 %v624
  %640 = vmatpush.bf16.msra.mxu0 %v623
  %641 = vmatpush.bf16.msra.mxu0 %v622
  %642 = vmatpush.bf16.msra.mxu0 %v621
  %643 = vmatpush.bf16.msra.mxu0 %v620
  %644 = vmatmul.bf16.gmra.mxu0 %v587
  %v645 = vpop.f32.mrf.mxu0
  %v646 = vadd.f32 0.0, %v645
  %v647 = vpop.f32.mrf.mxu0
  %v648 = vadd.f32 0.0, %v647
  %649 = vdwg.mxu0
  %v650 = vadd.f32 %v490, %v646
  %v651 = vadd.f32 %v491, %v648
  %v652 = vperm.slane %v178, 7
  %v653 = vadd.f32 %v650, %v652
  %v654 = vadd.f32 %v651, %v652
  %s655 = scalar_lea.vmem %s5, 8
  %v656 = vld [vmem:[%s655] sm:$0xff]
  %s657 = scalar_lea.vmem %s6, 32
  %v658 = vld [vmem:[%s657] sm:$0xff]
  %v659 = vld [vmem:[%s657 + $0x8] sm:$0xff]
  %v660 = vld [vmem:[%s657 + $0x10] sm:$0xff]
  %v661 = vld [vmem:[%s657 + $0x18] sm:$0xff]
  %s662 = scalar_lea.vmem %s7, 64
  %v663 = vld [vmem:[%s662] sm:$0xf]
  %v664 = vld [vmem:[%s662 + $0x4] sm:$0xf]
  %v665 = vld [vmem:[%s662 + $0x8] sm:$0xf]
  %v666 = vld [vmem:[%s662 + $0xc] sm:$0xf]
  %v667 = vld [vmem:[%s662 + $0x10] sm:$0xf]
  %v668 = vld [vmem:[%s662 + $0x14] sm:$0xf]
  %v669 = vld [vmem:[%s662 + $0x18] sm:$0xf]
  %v670 = vld [vmem:[%s662 + $0x1c] sm:$0xf]
  %v671 = vld [vmem:[%s662 + $0x20] sm:$0xf]
  %v672 = vld [vmem:[%s662 + $0x24] sm:$0xf]
  %v673 = vld [vmem:[%s662 + $0x28] sm:$0xf]
  %v674 = vld [vmem:[%s662 + $0x2c] sm:$0xf]
  %v675 = vld [vmem:[%s662 + $0x30] sm:$0xf]
  %v676 = vld [vmem:[%s662 + $0x34] sm:$0xf]
  %v677 = vld [vmem:[%s662 + $0x38] sm:$0xf]
  %v678 = vld [vmem:[%s662 + $0x3c] sm:$0xf]
  %v679 = vsel %vm199, %v653, 0.0
  %680 = vadd.xlane.f32.xlu0 %v679
  %v681 = vpop.xlane.xlu0 %680
  %v682 = vsel %vm203, %v654, 0.0
  %683 = vadd.xlane.f32.xlu0 %v682
  %v684 = vpop.xlane.xlu0 %683
  %v685 = vmul.f32 %v681, %v213
  %v686 = vmul.f32 %v684, %v213
  %v687 = vsub.f32 %v653, %v685
  %v688 = vsub.f32 %v654, %v686
  %v689 = vmul.f32 %v687, %v687
  %v690 = vmul.f32 %v688, %v688
  %v691 = vsel %vm199, %v689, 0.0
  %692 = vadd.xlane.f32.xlu0 %v691
  %v693 = vpop.xlane.xlu0 %692
  %v694 = vsel %vm203, %v690, 0.0
  %695 = vadd.xlane.f32.xlu0 %v694
  %v696 = vpop.xlane.xlu0 %695
  %v697 = vmul.f32 %v693, %v213
  %v698 = vmul.f32 %v696, %v213
  %v699 = vadd.f32 %v697, 1e-12
  %v700 = vadd.f32 %v698, 1e-12
  %v701 = vrsqrt.pop %v699
  %v702 = vmul.f32 %v701, %v699
  %v703 = vmul.f32 %v702, %v701
  %v704 = vmul.f32 0.5, %v703
  %v705 = vsub.f32 1.5, %v704
  %v706 = vmul.f32 %v701, %v705
  %vm707 = vweird.f32 %v699
  %vm708 = vweird.f32 %v701
  %vm709 = vmor %vm707, %vm708
  %v710 = vsel %vm709, %v701, %v706
  %v711 = vrsqrt.pop %v700
  %v712 = vmul.f32 %v711, %v700
  %v713 = vmul.f32 %v712, %v711
  %v714 = vmul.f32 0.5, %v713
  %v715 = vsub.f32 1.5, %v714
  %v716 = vmul.f32 %v711, %v715
  %vm717 = vweird.f32 %v700
  %vm718 = vweird.f32 %v711
  %vm719 = vmor %vm717, %vm718
  %v720 = vsel %vm719, %v711, %v716
  %v721 = vmul.f32 %v687, %v710
  %v722 = vmul.f32 %v688, %v720
  %v723 = vperm.slane %v656, 0
  %v724 = vmul.f32 %v721, %v723
  %v725 = vmul.f32 %v722, %v723
  %v726 = vperm.slane %v656, 1
  %v727 = vadd.f32 %v724, %v726
  %v728 = vadd.f32 %v725, %v726
  %v729 = vpack.c.bf16 %v728, %v727
  %v730 = vperm.slane %v656, 2
  %v735 = vunpack.c.l.b16 %v658
  %v736 = vunpack.c.l.b16 %v659
  %v737 = vunpack.c.l.b16 %v660
  %v738 = vunpack.c.l.b16 %v661
  %v739 = vpack.c.b16 %v736, %v735
  %v740 = vpack.c.b16 %v738, %v737
  %v744 = vsel %vm199, %v729, 0
  %746 = vmatpush.bf16.msra.mxu0 0
  %747 = vmatpush.bf16.msra.mxu0 0
  %748 = vmatpush.bf16.msra.mxu0 0
  %749 = vmatpush.bf16.msra.mxu0 0
  %750 = vmatpush.bf16.msra.mxu0 0
  %751 = vmatpush.bf16.msra.mxu0 0
  %752 = vmatpush.bf16.msra.mxu0 %v740
  %753 = vmatpush.bf16.msra.mxu0 %v739
  %754 = vmatmul.bf16.gmra.mxu0 %v744
  %v755 = vpop.f32.mrf.mxu0
  %v756 = vadd.f32 %v730, %v755
  %v757 = vpop.f32.mrf.mxu0
  %v758 = vadd.f32 %v730, %v757
  %759 = vdwg.mxu0
  %762 = vrot.lane.b32.xlu0 %v756, 112
  %v763 = vpop.permute.xlu0 %762
  %764 = vrot.lane.b32.xlu0 %v758, 112
  %v765 = vpop.permute.xlu0 %764
  %v768 = vpack.c.bf16 %v756, %v756
  %v769 = vpack.c.bf16 %v758, %v758
  %v770 = vpack.c.bf16 %v763, %v763
  %v771 = vpack.c.bf16 %v765, %v765
  %v774 = vunpack.c.l.b16 %v768
  %v775 = vunpack.c.l.b16 %v769
  %v776 = vpack.c.b16 %v775, %v774
  %777 = vrot.lane.b32.xlu0 %v776, 96
  %v778 = vpop.permute.xlu0 %777
  %v780 = vsel %vm308, %v776, 0
  %v783 = vsel %vm308, %v778, 0
  %785 = vmatpush.bf16.xpose.msra.mxu0 0
  %786 = vmatpush.bf16.xpose.msra.mxu0 0
  %787 = vmatpush.bf16.xpose.msra.mxu0 0
  %788 = vmatpush.bf16.xpose.msra.mxu0 0
  %789 = vmatpush.bf16.xpose.msra.mxu0 0
  %790 = vmatpush.bf16.xpose.msra.mxu0 0
  %791 = vmatpush.bf16.xpose.msra.mxu0 0
  %792 = vmatpush.bf16.xpose.msra.mxu0 %v783
  %793 = vmatmul.bf16.gmra.mxu0 %v780
  %v794 = vpop.f32.mrf.mxu0
  %v795 = vadd.f32 %v176, %v794
  %v796 = vpop.f32.mrf.mxu0
  %v797 = vadd.f32 %v177, %v796
  %798 = vdwg.mxu0
  %v801 = vunpack.c.l.b16 %v770
  %v802 = vunpack.c.l.b16 %v771
  %v803 = vpack.c.b16 %v802, %v801
  %804 = vrot.lane.b32.xlu0 %v803, 96
  %v805 = vpop.permute.xlu0 %804
  %v807 = vsel %vm308, %v803, 0
  %v810 = vsel %vm308, %v805, 0
  %812 = vmatpush.bf16.xpose.msra.mxu0 0
  %813 = vmatpush.bf16.xpose.msra.mxu0 0
  %814 = vmatpush.bf16.xpose.msra.mxu0 0
  %815 = vmatpush.bf16.xpose.msra.mxu0 0
  %816 = vmatpush.bf16.xpose.msra.mxu0 0
  %817 = vmatpush.bf16.xpose.msra.mxu0 0
  %818 = vmatpush.bf16.xpose.msra.mxu0 0
  %819 = vmatpush.bf16.xpose.msra.mxu0 %v810
  %820 = vmatmul.bf16.gmra.mxu0 %v807
  %v821 = vpop.f32.mrf.mxu0
  %v822 = vadd.f32 %v176, %v821
  %v823 = vpop.f32.mrf.mxu0
  %v824 = vadd.f32 %v177, %v823
  %825 = vdwg.mxu0
  %v826 = vmul.f32 %v795, 1.442695
  %v827 = vpow.pop %v826
  %v828 = vmul.f32 %v797, 1.442695
  %v829 = vpow.pop %v828
  %v830 = vmul.f32 %v822, 1.442695
  %v831 = vpow.pop %v830
  %v832 = vmul.f32 %v824, 1.442695
  %v833 = vpow.pop %v832
  %v834 = vsel %vm364, %v827, 0.0
  %835 = vadd.xlane.f32.xlu0 %v834
  %v836 = vpop.xlane.xlu0 %835
  %v837 = vsel %vm368, %v829, 0.0
  %838 = vadd.xlane.f32.xlu0 %v837
  %v839 = vpop.xlane.xlu0 %838
  %v840 = vsel %vm364, %v831, 0.0
  %841 = vadd.xlane.f32.xlu0 %v840
  %v842 = vpop.xlane.xlu0 %841
  %v843 = vsel %vm368, %v833, 0.0
  %844 = vadd.xlane.f32.xlu0 %v843
  %v845 = vpop.xlane.xlu0 %844
  %v846 = vrcp.pop %v836
  %v847 = vrcp.pop %v839
  %v848 = vrcp.pop %v842
  %v849 = vrcp.pop %v845
  %v850 = vmul.f32 %v827, %v846
  %v851 = vmul.f32 %v829, %v847
  %v852 = vmul.f32 %v831, %v848
  %v853 = vmul.f32 %v833, %v849
  %v854 = vpack.c.bf16 %v850, %v850
  %v855 = vpack.c.bf16 %v851, %v851
  %v856 = vpack.c.bf16 %v852, %v852
  %v857 = vpack.c.bf16 %v853, %v853
  %v860 = vunpack.c.l.b16 %v854
  %v861 = vunpack.c.l.b16 %v855
  %v862 = vpack.c.b16 %v861, %v860
  %863 = vrot.lane.b32.xlu0 %v776, 64
  %v864 = vpop.permute.xlu0 %863
  %v866 = vsel %vm364, %v862, 0
  %v869 = vsel %vm400, %v864, 0
  %871 = vmatpush.bf16.msra.mxu0 0
  %872 = vmatpush.bf16.msra.mxu0 0
  %873 = vmatpush.bf16.msra.mxu0 0
  %874 = vmatpush.bf16.msra.mxu0 0
  %875 = vmatpush.bf16.msra.mxu0 0
  %876 = vmatpush.bf16.msra.mxu0 0
  %877 = vmatpush.bf16.msra.mxu0 0
  %878 = vmatpush.bf16.msra.mxu0 %v869
  %879 = vmatmul.bf16.gmra.mxu0 %v866
  %v880 = vpop.f32.mrf.mxu0
  %v881 = vadd.f32 0.0, %v880
  %v882 = vpop.f32.mrf.mxu0
  %v883 = vadd.f32 0.0, %v882
  %884 = vdwg.mxu0
  %v887 = vunpack.c.l.b16 %v856
  %v888 = vunpack.c.l.b16 %v857
  %v889 = vpack.c.b16 %v888, %v887
  %890 = vrot.lane.b32.xlu0 %v803, 64
  %v891 = vpop.permute.xlu0 %890
  %v893 = vsel %vm364, %v889, 0
  %v896 = vsel %vm400, %v891, 0
  %898 = vmatpush.bf16.msra.mxu0 0
  %899 = vmatpush.bf16.msra.mxu0 0
  %900 = vmatpush.bf16.msra.mxu0 0
  %901 = vmatpush.bf16.msra.mxu0 0
  %902 = vmatpush.bf16.msra.mxu0 0
  %903 = vmatpush.bf16.msra.mxu0 0
  %904 = vmatpush.bf16.msra.mxu0 0
  %905 = vmatpush.bf16.msra.mxu0 %v896
  %906 = vmatmul.bf16.gmra.mxu0 %v893
  %v907 = vpop.f32.mrf.mxu0
  %v908 = vadd.f32 0.0, %v907
  %v909 = vpop.f32.mrf.mxu0
  %v910 = vadd.f32 0.0, %v909
  %911 = vdwg.mxu0
  %v912 = vpack.c.bf16 %v883, %v881
  %v913 = vpack.c.bf16 %v910, %v908
  %914 = vrot.lane.b32.xlu0 %v740, 32
  %v915 = vpop.permute.xlu0 %914
  %v918 = vsel %vm308, %v913, 0
  %920 = vmatpush.bf16.msra.mxu0 0
  %921 = vmatpush.bf16.msra.mxu0 0
  %922 = vmatpush.bf16.msra.mxu0 0
  %923 = vmatpush.bf16.msra.mxu0 0
  %924 = vmatpush.bf16.msra.mxu0 0
  %925 = vmatpush.bf16.msra.mxu0 0
  %926 = vmatpush.bf16.msra.mxu0 0
  %927 = vmatpush.bf16.msra.mxu0 %v915
  %928 = vmatmul.bf16.gmra.mxu0 %v918
  %v929 = vpop.f32.mrf.mxu0
  %v930 = vadd.f32 0.0, %v929
  %v931 = vpop.f32.mrf.mxu0
  %v932 = vadd.f32 0.0, %v931
  %933 = vdwg.mxu0
  %934 = vrot.lane.b32.xlu0 %v739, 32
  %v935 = vpop.permute.xlu0 %934
  %v938 = vsel %vm308, %v912, 0
  %940 = vmatpush.bf16.msra.mxu0 0
  %941 = vmatpush.bf16.msra.mxu0 0
  %942 = vmatpush.bf16.msra.mxu0 0
  %943 = vmatpush.bf16.msra.mxu0 0
  %944 = vmatpush.bf16.msra.mxu0 0
  %945 = vmatpush.bf16.msra.mxu0 0
  %946 = vmatpush.bf16.msra.mxu0 0
  %947 = vmatpush.bf16.msra.mxu0 %v935
  %948 = vmatmul.bf16.gmra.mxu0 %v938
  %v949 = vpop.f32.mrf.mxu0
  %v950 = vadd.f32 %v930, %v949
  %v951 = vpop.f32.mrf.mxu0
  %v952 = vadd.f32 %v932, %v951
  %953 = vdwg.mxu0
  %v954 = vadd.f32 %v653, %v950
  %v955 = vadd.f32 %v654, %v952
  %v956 = vperm.slane %v656, 3
  %v957 = vadd.f32 %v954, %v956
  %v958 = vadd.f32 %v955, %v956
  %v959 = vsel %vm199, %v957, 0.0
  %960 = vadd.xlane.f32.xlu0 %v959
  %v961 = vpop.xlane.xlu0 %960
  %v962 = vsel %vm203, %v958, 0.0
  %963 = vadd.xlane.f32.xlu0 %v962
  %v964 = vpop.xlane.xlu0 %963
  %v965 = vmul.f32 %v961, %v213
  %v966 = vmul.f32 %v964, %v213
  %v967 = vsub.f32 %v957, %v965
  %v968 = vsub.f32 %v958, %v966
  %v969 = vmul.f32 %v967, %v967
  %v970 = vmul.f32 %v968, %v968
  %v971 = vsel %vm199, %v969, 0.0
  %972 = vadd.xlane.f32.xlu0 %v971
  %v973 = vpop.xlane.xlu0 %972
  %v974 = vsel %vm203, %v970, 0.0
  %975 = vadd.xlane.f32.xlu0 %v974
  %v976 = vpop.xlane.xlu0 %975
  %v977 = vmul.f32 %v973, %v213
  %v978 = vmul.f32 %v976, %v213
  %v979 = vadd.f32 %v977, 1e-12
  %v980 = vadd.f32 %v978, 1e-12
  %v981 = vrsqrt.pop %v979
  %v982 = vmul.f32 %v981, %v979
  %v983 = vmul.f32 %v982, %v981
  %v984 = vmul.f32 0.5, %v983
  %v985 = vsub.f32 1.5, %v984
  %v986 = vmul.f32 %v981, %v985
  %vm987 = vweird.f32 %v979
  %vm988 = vweird.f32 %v981
  %vm989 = vmor %vm987, %vm988
  %v990 = vsel %vm989, %v981, %v986
  %v991 = vrsqrt.pop %v980
  %v992 = vmul.f32 %v991, %v980
  %v993 = vmul.f32 %v992, %v991
  %v994 = vmul.f32 0.5, %v993
  %v995 = vsub.f32 1.5, %v994
  %v996 = vmul.f32 %v991, %v995
  %vm997 = vweird.f32 %v980
  %vm998 = vweird.f32 %v991
  %vm999 = vmor %vm997, %vm998
  %v1000 = vsel %vm999, %v991, %v996
  %v1001 = vmul.f32 %v967, %v990
  %v1002 = vmul.f32 %v968, %v1000
  %v1003 = vperm.slane %v656, 4
  %v1004 = vmul.f32 %v1001, %v1003
  %v1005 = vmul.f32 %v1002, %v1003
  %v1006 = vperm.slane %v656, 5
  %v1007 = vadd.f32 %v1004, %v1006
  %v1008 = vadd.f32 %v1005, %v1006
  %v1009 = vpack.c.bf16 %v1008, %v1007
  %v1010 = vperm.slane %v656, 6
  %v1011 = vunpack.c.h.b16 %v658
  %v1012 = vunpack.c.h.b16 %v659
  %v1013 = vunpack.c.h.b16 %v660
  %v1014 = vunpack.c.h.b16 %v661
  %v1015 = vpack.c.b16 %v1012, %v1011
  %v1016 = vpack.c.b16 %v1014, %v1013
  %v1020 = vsel %vm199, %v1009, 0
  %1022 = vmatpush.bf16.msra.mxu0 0
  %1023 = vmatpush.bf16.msra.mxu0 0
  %1024 = vmatpush.bf16.msra.mxu0 0
  %1025 = vmatpush.bf16.msra.mxu0 0
  %1026 = vmatpush.bf16.msra.mxu0 0
  %1027 = vmatpush.bf16.msra.mxu0 0
  %1028 = vmatpush.bf16.msra.mxu0 %v1016
  %1029 = vmatpush.bf16.msra.mxu0 %v1015
  %1030 = vmatmul.bf16.gmra.mxu0 %v1020
  %v1031 = vpop.f32.mrf.mxu0
  %v1032 = vadd.f32 %v1010, %v1031
  %v1033 = vpop.f32.mrf.mxu0
  %v1034 = vadd.f32 %v1010, %v1033
  %1035 = vdwg.mxu0
  %v1036 = vmul.f32 %v1032, 0.5
  %v1037 = vmul.f32 %v1034, 0.5
  %v1038 = vmul.f32 %v1032, 0.044715
  %v1039 = vmul.f32 %v1034, 0.044715
  %v1040 = vmul.f32 %v1038, %v1032
  %v1041 = vmul.f32 %v1039, %v1034
  %v1042 = vmul.f32 %v1040, %v1032
  %v1043 = vmul.f32 %v1041, %v1034
  %v1044 = vadd.f32 %v1032, %v1042
  %v1045 = vadd.f32 %v1034, %v1043
  %v1046 = vmul.f32 %v1044, 0.7978846
  %v1047 = vmul.f32 %v1045, 0.7978846
  %v1048 = vtanh.pop %v1046
  %v1049 = vtanh.pop %v1047
  %v1050 = vadd.f32 %v1048, 1.0
  %v1051 = vadd.f32 %v1049, 1.0
  %v1052 = vmul.f32 %v1036, %v1050
  %v1053 = vmul.f32 %v1037, %v1051
  %v1054 = vpack.c.bf16 %v1053, %v1052
  %v1071 = vunpack.c.l.b16 %v663
  %v1072 = vunpack.c.l.b16 %v664
  %v1073 = vunpack.c.l.b16 %v665
  %v1074 = vunpack.c.l.b16 %v666
  %v1075 = vunpack.c.l.b16 %v667
  %v1076 = vunpack.c.l.b16 %v668
  %v1077 = vunpack.c.l.b16 %v669
  %v1078 = vunpack.c.l.b16 %v670
  %v1079 = vunpack.c.l.b16 %v671
  %v1080 = vunpack.c.l.b16 %v672
  %v1081 = vunpack.c.l.b16 %v673
  %v1082 = vunpack.c.l.b16 %v674
  %v1083 = vunpack.c.l.b16 %v675
  %v1084 = vunpack.c.l.b16 %v676
  %v1085 = vunpack.c.l.b16 %v677
  %v1086 = vunpack.c.l.b16 %v678
  %v1087 = vpack.c.b16 %v1072, %v1071
  %v1088 = vpack.c.b16 %v1074, %v1073
  %v1089 = vpack.c.b16 %v1076, %v1075
  %v1090 = vpack.c.b16 %v1078, %v1077
  %v1091 = vpack.c.b16 %v1080, %v1079
  %v1092 = vpack.c.b16 %v1082, %v1081
  %v1093 = vpack.c.b16 %v1084, %v1083
  %v1094 = vpack.c.b16 %v1086, %v1085
  %1103 = vmatpush.bf16.msra.mxu0 %v1094
  %1104 = vmatpush.bf16.msra.mxu0 %v1093
  %1105 = vmatpush.bf16.msra.mxu0 %v1092
  %1106 = vmatpush.bf16.msra.mxu0 %v1091
  %1107 = vmatpush.bf16.msra.mxu0 %v1090
  %1108 = vmatpush.bf16.msra.mxu0 %v1089
  %1109 = vmatpush.bf16.msra.mxu0 %v1088
  %1110 = vmatpush.bf16.msra.mxu0 %v1087
  %1111 = vmatmul.bf16.gmra.mxu0 %v1054
  %v1112 = vpop.f32.mrf.mxu0
  %v1113 = vadd.f32 0.0, %v1112
  %v1114 = vpop.f32.mrf.mxu0
  %1115 = vdwg.mxu0
  %v1116 = vadd.f32 %v957, %v1113
  %v1117 = vperm.slane %v656, 7
  %v1118 = vadd.f32 %v1116, %v1117
  %v1120 = vrot.slane %v1118, 4
  %vm1122 = vcmask 1040384
  %v1123 = vsel %vm1122, %v1118, %v1120
  %vm1124 = vcmask 1041408
  %v1125 = vsel %vm1124, %v1123, 0.0
  %v1126 = vld [vmem:[%s4] sm:$0x1]
  %v1127 = vld [vmem:[%s4 + $0x1] sm:$0x1]
  %v1128 = vld [vmem:[%s4 + $0x2] sm:$0x1]
  %v1129 = vsel %vm199, %v1125, 0.0
  %1130 = vadd.xlane.f32.xlu0 %v1129
  %v1131 = vpop.xlane.xlu0 %1130
  %v1132 = vmul.f32 %v1131, %v213
  %v1133 = vsub.f32 %v1125, %v1132
  %v1134 = vmul.f32 %v1133, %v1133
  %v1135 = vsel %vm199, %v1134, 0.0
  %1136 = vadd.xlane.f32.xlu0 %v1135
  %v1137 = vpop.xlane.xlu0 %1136
  %v1138 = vmul.f32 %v1137, %v213
  %v1139 = vadd.f32 %v1138, 1e-12
  %v1140 = vrsqrt.pop %v1139
  %v1141 = vmul.f32 %v1140, %v1139
  %v1142 = vmul.f32 %v1141, %v1140
  %v1143 = vmul.f32 0.5, %v1142
  %v1144 = vsub.f32 1.5, %v1143
  %v1145 = vmul.f32 %v1140, %v1144
  %vm1146 = vweird.f32 %v1139
  %vm1147 = vweird.f32 %v1140
  %vm1148 = vmor %vm1146, %vm1147
  %v1149 = vsel %vm1148, %v1140, %v1145
  %v1150 = vmul.f32 %v1133, %v1149
  %v1151 = vperm.slane %v1126, 0
  %v1152 = vmul.f32 %v1150, %v1151
  %v1153 = vperm.slane %v1127, 0
  %v1154 = vadd.f32 %v1152, %v1153
  %v1155 = vpack.c.bf16 %v1154, %v1154
  %v1156 = vld [vmem:[%s8] sm:$0xf]
  %v1157 = vld [vmem:[%s8 + $0x4] sm:$0xf]
  %v1158 = vld [vmem:[%s8 + $0x8] sm:$0xf]
  %v1159 = vld [vmem:[%s8 + $0xc] sm:$0xf]
  %v1160 = vperm.slane %v1128, 0
  %v1165 = vunpack.c.l.b16 %v1156
  %v1166 = vunpack.c.l.b16 %v1157
  %v1167 = vunpack.c.l.b16 %v1158
  %v1168 = vunpack.c.l.b16 %v1159
  %v1169 = vpack.c.b16 %v1166, %v1165
  %v1170 = vpack.c.b16 %v1168, %v1167
  %v1174 = vsel %vm199, %v1155, 0
  %1176 = vmatpush.bf16.msra.mxu0 0
  %1177 = vmatpush.bf16.msra.mxu0 0
  %1178 = vmatpush.bf16.msra.mxu0 0
  %1179 = vmatpush.bf16.msra.mxu0 0
  %1180 = vmatpush.bf16.msra.mxu0 0
  %1181 = vmatpush.bf16.msra.mxu0 0
  %1182 = vmatpush.bf16.msra.mxu0 %v1170
  %1183 = vmatpush.bf16.msra.mxu0 %v1169
  %1184 = vmatmul.bf16.gmra.mxu0 %v1174
  %v1185 = vpop.f32.mrf.mxu0
  %v1186 = vadd.f32 %v1160, %v1185
  %v1187 = vpop.f32.mrf.mxu0
  %1188 = vdwg.mxu0
  %1189 = vst [vmem:[%s9] sm:$0xff] %v1186
  // Predicated region
  $region38: #{vit_forward.1} parent=0 // pred_check
    _
  $region39: #{vit_forward.1} parent=0 // pred_check_branch
    %1191 = sbr.rel (0) target = $region41
  $region40: #{vit_forward.1} parent=0 // pred_region
    _
  $region41: #{vit_forward.1} parent=0 // pred_fallthru
    _
  // Predicated region
  $region42: #{vit_forward.1} parent=0 // pred_check
    _
  $region43: #{vit_forward.1} parent=0 // pred_check_branch
    %1193 = sbr.rel (0) target = $region45
  $region44: #{vit_forward.1} parent=0 // pred_region
    _
  $region45: #{vit_forward.1} parent=0 // pred_fallthru
    _

</llo_original>
